<compile_context>
chip_gen: v5e
topology: v5e:2x2
jax: 0.10.0
libtpu: 0.0.40
codegen_flags: <defaults>
</compile_context>

<pallas_src>
import jax
import jax.numpy as jnp
from jax import lax
from jax.experimental import pallas as pl
from jax.experimental.pallas import tpu as pltpu


def bilstm_fused_kernel(emb_ref,            # (S*Bp, E) f32, time-major rows
                        wih_ref,            # (E, 8H)  [fwd i,f,o,g | bwd i,f,o,g]
                        bias_ref,           # (1, 8H)
                        whh_f_ref,          # (H, 4H)  fwd recurrent weights (i,f,o,g)
                        whh_b_ref,          # (H, 4H)  bwd recurrent weights (i,f,o,g)
                        w1_ref, b1_ref,     # (4H, 64) (1, 64)
                        w2_ref, b2_ref,     # (64, O)  (1, O)
                        out_ref,            # (Bp, O)
                        gxf_ref,            # scratch (S, Bp, 4H) fwd pre-projected gates
                        gxb_ref):           # scratch (S, Bp, 4H) bwd pre-projected gates
    S, Bp, H4 = gxf_ref.shape
    H = H4 // 4

    # ---- hoisted input projection: one big matmul + bias, off the serial path.
    # TODO(synk): cast MXU operands to bf16 on v6e/v7x (keep f32 accumulation);
    # kept f32 here for exact parity with the f32 reference.
    gx = (jnp.dot(emb_ref[...], wih_ref[...], preferred_element_type=jnp.float32)
          + bias_ref[...])                                     # (S*Bp, 8H)
    for t in range(S):                                         # static, tile-aligned repack
        blk = gx[t * Bp:(t + 1) * Bp, :]
        gxf_ref[t] = blk[:, 0:H4]
        gxb_ref[t] = blk[:, H4:2 * H4]

    # loop-invariant recurrent weights (hoisted loads)
    whh_f = whh_f_ref[...]
    whh_b = whh_b_ref[...]

    def cell(gates, c_prev):
        # gate order [i, f, o, g]: one sigmoid over 3H, one tanh over H
        sg = jax.nn.sigmoid(gates[:, 0:3 * H])
        i_t = sg[:, 0:H]
        f_t = sg[:, H:2 * H]
        o_t = sg[:, 2 * H:3 * H]
        g_t = jnp.tanh(gates[:, 3 * H:4 * H])
        c_new = f_t * c_prev + i_t * g_t
        h_new = o_t * jnp.tanh(c_new)
        return h_new, c_new

    # ---- peeled first step: h_prev == 0, so no recurrent matmul; pooling
    # accumulators start directly from h_0 of each direction.
    c_zero = jnp.zeros((Bp, H), jnp.float32)
    hf, cf = cell(gxf_ref[0], c_zero)        # fwd consumes x[0]
    hb, cb = cell(gxb_ref[S - 1], c_zero)    # bwd consumes x[S-1]

    # ---- fused bidirectional recurrence; state + pooling accumulators in vregs
    def step(t, carry):
        hf, cf, hb, cb, s_f, s_b, m_f, m_b = carry
        g_f = gxf_ref[t] + jnp.dot(hf, whh_f, preferred_element_type=jnp.float32)
        g_b = gxb_ref[S - 1 - t] + jnp.dot(hb, whh_b, preferred_element_type=jnp.float32)
        hf, cf = cell(g_f, cf)
        hb, cb = cell(g_b, cb)
        # incremental avg/max pooling (time order irrelevant for mean/max)
        return (hf, cf, hb, cb,
                s_f + hf, s_b + hb,
                jnp.maximum(m_f, hf), jnp.maximum(m_b, hb))

    init = (hf, cf, hb, cb, hf, hb, hf, hb)
    _, _, _, _, s_f, s_b, m_f, m_b = lax.fori_loop(1, S, step, init, unroll=True)

    # ---- MLP head: conc = [avg_f, avg_b, max_f, max_b]; avoid the concat by
    # splitting w1 into its four row blocks (static sublane slices, H % 8 == 0).
    inv_s = 1.0 / float(S)
    a_f = s_f * inv_s
    a_b = s_b * inv_s
    hid = (jnp.dot(a_f, w1_ref[0:H, :], preferred_element_type=jnp.float32)
           + jnp.dot(a_b, w1_ref[H:2 * H, :], preferred_element_type=jnp.float32)
           + jnp.dot(m_f, w1_ref[2 * H:3 * H, :], preferred_element_type=jnp.float32)
           + jnp.dot(m_b, w1_ref[3 * H:4 * H, :], preferred_element_type=jnp.float32)
           + b1_ref[...])
    hid = jnp.maximum(hid, 0.0)
    # TODO(synk): nn.Dropout is identity at inference; training-mode dropout
    # (pltpu.prng_*) not implemented.
    out_ref[...] = (jnp.dot(hid, w2_ref[...], preferred_element_type=jnp.float32)
                    + b2_ref[...])


def _reorder_gates(w, H):
    """PyTorch gate order (i, f, g, o) -> kernel order (i, f, o, g) on last axis."""
    return jnp.concatenate([w[..., 0:2 * H], w[..., 3 * H:4 * H], w[..., 2 * H:3 * H]],
                           axis=-1)


def bilstm_forward(x_tokens, params):
    # Embedding lookup (gather) kept as JAX glue.
    emb = jnp.take(params["embedding"], x_tokens, axis=0)          # (B, S, E)
    B, S, E = emb.shape
    H = params["whh_f"].shape[0]
    O = params["b2"].shape[-1]

    # Pad batch to a multiple of 8 so f32 sublanes are full inside the kernel.
    Bp = ((B + 7) // 8) * 8
    emb_p = jnp.pad(emb, ((0, Bp - B), (0, 0), (0, 0)))
    # Time-major, flattened so the input projection is one well-shaped matmul.
    emb_flat = jnp.swapaxes(emb_p, 0, 1).reshape(S * Bp, E).astype(jnp.float32)

    # One-time weight plumbing: gate reorder + concat both directions' input
    # projections into a single (E, 8H) weight and (1, 8H) bias.
    wih_all = jnp.concatenate([_reorder_gates(params["wih_f"], H),
                               _reorder_gates(params["wih_b"], H)], axis=-1)
    bias_all = jnp.concatenate([_reorder_gates(params["b_f"], H),
                                _reorder_gates(params["b_b"], H)], axis=-1)
    whh_f = _reorder_gates(params["whh_f"], H)
    whh_b = _reorder_gates(params["whh_b"], H)

    # TODO(synk): for realistic S/B/E, stream the embedded sequence via a grid
    # over time chunks (BlockSpec on emb) instead of holding it all in VMEM.
    kernel = pl.pallas_call(
        bilstm_fused_kernel,
        out_shape=jax.ShapeDtypeStruct((Bp, O), jnp.float32),
        in_specs=[pl.BlockSpec(memory_space=pltpu.MemorySpace.VMEM)] * 9,
        out_specs=pl.BlockSpec(memory_space=pltpu.MemorySpace.VMEM),
        scratch_shapes=[
            pltpu.VMEM((S, Bp, 4 * H), jnp.float32),   # fwd pre-projected gates
            pltpu.VMEM((S, Bp, 4 * H), jnp.float32),   # bwd pre-projected gates
        ],
    )
    out = kernel(emb_flat, wih_all, bias_all, whh_f, whh_b,
                 params["w1"], params["b1"], params["w2"], params["b2"])
    return out[:B]


def bilstm_reference(x_tokens, p):
    """Pure-JAX reference mirroring the PyTorch forward (gate order i,f,g,o)."""
    emb = jnp.take(p["embedding"], x_tokens, axis=0)               # (B, S, E)
    B = emb.shape[0]

    def run_dir(wih, whh, b, reverse):
        H = whh.shape[0]
        xs = jnp.swapaxes(emb, 0, 1)                               # (S, B, E)
        if reverse:
            xs = xs[::-1]

        def step(carry, x_t):
            h, c = carry
            gates = x_t @ wih + h @ whh + b
            i = jax.nn.sigmoid(gates[:, :H])
            f = jax.nn.sigmoid(gates[:, H:2 * H])
            g = jnp.tanh(gates[:, 2 * H:3 * H])
            o = jax.nn.sigmoid(gates[:, 3 * H:])
            c = f * c + i * g
            h = o * jnp.tanh(c)
            return (h, c), h

        init = (jnp.zeros((B, H), jnp.float32), jnp.zeros((B, H), jnp.float32))
        _, hs = lax.scan(step, init, xs)
        if reverse:
            hs = hs[::-1]
        return jnp.swapaxes(hs, 0, 1)                              # (B, S, H)

    hf = run_dir(p["wih_f"], p["whh_f"], p["b_f"], False)
    hb = run_dir(p["wih_b"], p["whh_b"], p["b_b"], True)
    h_lstm = jnp.concatenate([hf, hb], axis=-1)                    # (B, S, 2H)
    avg = jnp.mean(h_lstm, axis=1)
    mx = jnp.max(h_lstm, axis=1)
    conc = jnp.concatenate([avg, mx], axis=-1)
    hid = jnp.maximum(conc @ p["w1"] + p["b1"], 0.0)
    return hid @ p["w2"] + p["b2"]


def init_params(key, vocab_size, E, H, outdim):
    ks = jax.random.split(key, 11)
    u = lambda kk, shape, s: jax.random.uniform(kk, shape, jnp.float32, -s, s)
    k_lstm = 1.0 / float(jnp.sqrt(H))
    k_l1 = 1.0 / float(jnp.sqrt(4 * H))
    k_l2 = 1.0 / float(jnp.sqrt(64))
    emb = jax.random.normal(ks[0], (vocab_size, E), jnp.float32) * 0.1
    emb = emb.at[0].set(0.0)   # padding_idx=0 style row
    return dict(
        embedding=emb,
        # LSTM weights stored pre-transposed: (in, 4H); bias = b_ih + b_hh.
        wih_f=u(ks[1], (E, 4 * H), k_lstm),
        whh_f=u(ks[2], (H, 4 * H), k_lstm),
        b_f=u(ks[3], (1, 4 * H), k_lstm),
        wih_b=u(ks[4], (E, 4 * H), k_lstm),
        whh_b=u(ks[5], (H, 4 * H), k_lstm),
        b_b=u(ks[6], (1, 4 * H), k_lstm),
        w1=u(ks[7], (4 * H, 64), k_l1),
        b1=u(ks[8], (1, 64), k_l1),
        w2=u(ks[9], (64, outdim), k_l2),
        b2=u(ks[10], (1, outdim), k_l2),
    )


if __name__ == "__main__":
    vocab_size, E, H, outdim = 50, 32, 32, 1
    B, S = 2, 8

    key = jax.random.PRNGKey(0)
    pkey, xkey = jax.random.split(key)
    params = init_params(pkey, vocab_size, E, H, outdim)
    x = jax.random.randint(xkey, (B, S), 0, vocab_size, dtype=jnp.int32)

    out = bilstm_forward(x, params)
    out = jax.block_until_ready(out)

    ref = bilstm_reference(x, params)
    assert out.shape == (B, outdim), out.shape
    assert jnp.allclose(out, ref, atol=1e-3, rtol=1e-3), (out, ref)
    print("KERNEL_OK")
</pallas_src>

<mosaic_0001>
module attributes {stable_mosaic.version = 11 : i64} {
  func.func @bilstm_fused_kernel(%arg0: memref<64x32xf32, #tpu.memory_space<vmem>>, %arg1: memref<32x256xf32, #tpu.memory_space<vmem>>, %arg2: memref<1x256xf32, #tpu.memory_space<vmem>>, %arg3: memref<32x128xf32, #tpu.memory_space<vmem>>, %arg4: memref<32x128xf32, #tpu.memory_space<vmem>>, %arg5: memref<128x64xf32, #tpu.memory_space<vmem>>, %arg6: memref<1x64xf32, #tpu.memory_space<vmem>>, %arg7: memref<64x1xf32, #tpu.memory_space<vmem>>, %arg8: memref<1x1xf32, #tpu.memory_space<vmem>>, %arg9: memref<8x1xf32, #tpu.memory_space<vmem>>, %arg10: memref<8x8x128xf32, #tpu.memory_space<vmem>>, %arg11: memref<8x8x128xf32, #tpu.memory_space<vmem>>) attributes {dimension_semantics = [], scalar_prefetch = 0 : i64, scratch_operands = 2 : i64, tpu.core_type = #tpu.core_type<tc>} {
    %c0 = arith.constant 0 : index
    %c0_0 = arith.constant 0 : index
    %0 = vector.load %arg0[%c0, %c0_0] : memref<64x32xf32, #tpu.memory_space<vmem>>, vector<64x32xf32>
    %c0_1 = arith.constant 0 : index
    %c0_2 = arith.constant 0 : index
    %1 = vector.load %arg1[%c0_1, %c0_2] : memref<32x256xf32, #tpu.memory_space<vmem>>, vector<32x256xf32>
    %cst = arith.constant dense<0.000000e+00> : vector<64x256xf32>
    %2 = tpu.matmul %0, %1, %cst {dimension_numbers = #tpu.dot_dimension_numbers<[1], [0], [0], [1], [0, 0, 1, 1], [], []>} : vector<64x32xf32>, vector<32x256xf32>, vector<64x256xf32> -> vector<64x256xf32>
    %c0_3 = arith.constant 0 : index
    %c0_4 = arith.constant 0 : index
    %3 = vector.load %arg2[%c0_3, %c0_4] : memref<1x256xf32, #tpu.memory_space<vmem>>, vector<1x256xf32>
    %4 = vector.broadcast %3 : vector<1x256xf32> to vector<64x256xf32>
    %5 = arith.addf %2, %4 : vector<64x256xf32>
    %6 = vector.extract_strided_slice %5 {offsets = [0, 0], sizes = [8, 256], strides = [1, 1]} : vector<64x256xf32> to vector<8x256xf32>
    %7 = vector.extract_strided_slice %6 {offsets = [0, 0], sizes = [8, 128], strides = [1, 1]} : vector<8x256xf32> to vector<8x128xf32>
    %c0_5 = arith.constant 0 : index
    %c0_6 = arith.constant 0 : index
    %c0_7 = arith.constant 0 : index
    %8 = vector.load %arg10[%c0_5, %c0_6, %c0_7] : memref<8x8x128xf32, #tpu.memory_space<vmem>>, vector<1x8x128xf32>
    %9 = vector.shape_cast %8 : vector<1x8x128xf32> to vector<8x128xf32>
    %10 = vector.shape_cast %7 : vector<8x128xf32> to vector<1x8x128xf32>
    tpu.vector_store %arg10[%c0_5, %c0_6, %c0_7], %10 {strides = array<i32>} : memref<8x8x128xf32, #tpu.memory_space<vmem>>, vector<1x8x128xf32>,
    %11 = vector.extract_strided_slice %6 {offsets = [0, 128], sizes = [8, 128], strides = [1, 1]} : vector<8x256xf32> to vector<8x128xf32>
    %c0_8 = arith.constant 0 : index
    %c0_9 = arith.constant 0 : index
    %c0_10 = arith.constant 0 : index
    %12 = vector.load %arg11[%c0_8, %c0_9, %c0_10] : memref<8x8x128xf32, #tpu.memory_space<vmem>>, vector<1x8x128xf32>
    %13 = vector.shape_cast %12 : vector<1x8x128xf32> to vector<8x128xf32>
    %14 = vector.shape_cast %11 : vector<8x128xf32> to vector<1x8x128xf32>
    tpu.vector_store %arg11[%c0_8, %c0_9, %c0_10], %14 {strides = array<i32>} : memref<8x8x128xf32, #tpu.memory_space<vmem>>, vector<1x8x128xf32>,
    %15 = vector.extract_strided_slice %5 {offsets = [8, 0], sizes = [8, 256], strides = [1, 1]} : vector<64x256xf32> to vector<8x256xf32>
    %16 = vector.extract_strided_slice %15 {offsets = [0, 0], sizes = [8, 128], strides = [1, 1]} : vector<8x256xf32> to vector<8x128xf32>
    %c1 = arith.constant 1 : index
    %c0_11 = arith.constant 0 : index
    %c0_12 = arith.constant 0 : index
    %17 = vector.load %arg10[%c1, %c0_11, %c0_12] : memref<8x8x128xf32, #tpu.memory_space<vmem>>, vector<1x8x128xf32>
    %18 = vector.shape_cast %17 : vector<1x8x128xf32> to vector<8x128xf32>
    %19 = vector.shape_cast %16 : vector<8x128xf32> to vector<1x8x128xf32>
    tpu.vector_store %arg10[%c1, %c0_11, %c0_12], %19 {strides = array<i32>} : memref<8x8x128xf32, #tpu.memory_space<vmem>>, vector<1x8x128xf32>,
    %20 = vector.extract_strided_slice %15 {offsets = [0, 128], sizes = [8, 128], strides = [1, 1]} : vector<8x256xf32> to vector<8x128xf32>
    %c1_13 = arith.constant 1 : index
    %c0_14 = arith.constant 0 : index
    %c0_15 = arith.constant 0 : index
    %21 = vector.load %arg11[%c1_13, %c0_14, %c0_15] : memref<8x8x128xf32, #tpu.memory_space<vmem>>, vector<1x8x128xf32>
    %22 = vector.shape_cast %21 : vector<1x8x128xf32> to vector<8x128xf32>
    %23 = vector.shape_cast %20 : vector<8x128xf32> to vector<1x8x128xf32>
    tpu.vector_store %arg11[%c1_13, %c0_14, %c0_15], %23 {strides = array<i32>} : memref<8x8x128xf32, #tpu.memory_space<vmem>>, vector<1x8x128xf32>,
    %24 = vector.extract_strided_slice %5 {offsets = [16, 0], sizes = [8, 256], strides = [1, 1]} : vector<64x256xf32> to vector<8x256xf32>
    %25 = vector.extract_strided_slice %24 {offsets = [0, 0], sizes = [8, 128], strides = [1, 1]} : vector<8x256xf32> to vector<8x128xf32>
    %c2 = arith.constant 2 : index
    %c0_16 = arith.constant 0 : index
    %c0_17 = arith.constant 0 : index
    %26 = vector.load %arg10[%c2, %c0_16, %c0_17] : memref<8x8x128xf32, #tpu.memory_space<vmem>>, vector<1x8x128xf32>
    %27 = vector.shape_cast %26 : vector<1x8x128xf32> to vector<8x128xf32>
    %28 = vector.shape_cast %25 : vector<8x128xf32> to vector<1x8x128xf32>
    tpu.vector_store %arg10[%c2, %c0_16, %c0_17], %28 {strides = array<i32>} : memref<8x8x128xf32, #tpu.memory_space<vmem>>, vector<1x8x128xf32>,
    %29 = vector.extract_strided_slice %24 {offsets = [0, 128], sizes = [8, 128], strides = [1, 1]} : vector<8x256xf32> to vector<8x128xf32>
    %c2_18 = arith.constant 2 : index
    %c0_19 = arith.constant 0 : index
    %c0_20 = arith.constant 0 : index
    %30 = vector.load %arg11[%c2_18, %c0_19, %c0_20] : memref<8x8x128xf32, #tpu.memory_space<vmem>>, vector<1x8x128xf32>
    %31 = vector.shape_cast %30 : vector<1x8x128xf32> to vector<8x128xf32>
    %32 = vector.shape_cast %29 : vector<8x128xf32> to vector<1x8x128xf32>
    tpu.vector_store %arg11[%c2_18, %c0_19, %c0_20], %32 {strides = array<i32>} : memref<8x8x128xf32, #tpu.memory_space<vmem>>, vector<1x8x128xf32>,
    %33 = vector.extract_strided_slice %5 {offsets = [24, 0], sizes = [8, 256], strides = [1, 1]} : vector<64x256xf32> to vector<8x256xf32>
    %34 = vector.extract_strided_slice %33 {offsets = [0, 0], sizes = [8, 128], strides = [1, 1]} : vector<8x256xf32> to vector<8x128xf32>
    %c3 = arith.constant 3 : index
    %c0_21 = arith.constant 0 : index
    %c0_22 = arith.constant 0 : index
    %35 = vector.load %arg10[%c3, %c0_21, %c0_22] : memref<8x8x128xf32, #tpu.memory_space<vmem>>, vector<1x8x128xf32>
    %36 = vector.shape_cast %35 : vector<1x8x128xf32> to vector<8x128xf32>
    %37 = vector.shape_cast %34 : vector<8x128xf32> to vector<1x8x128xf32>
    tpu.vector_store %arg10[%c3, %c0_21, %c0_22], %37 {strides = array<i32>} : memref<8x8x128xf32, #tpu.memory_space<vmem>>, vector<1x8x128xf32>,
    %38 = vector.extract_strided_slice %33 {offsets = [0, 128], sizes = [8, 128], strides = [1, 1]} : vector<8x256xf32> to vector<8x128xf32>
    %c3_23 = arith.constant 3 : index
    %c0_24 = arith.constant 0 : index
    %c0_25 = arith.constant 0 : index
    %39 = vector.load %arg11[%c3_23, %c0_24, %c0_25] : memref<8x8x128xf32, #tpu.memory_space<vmem>>, vector<1x8x128xf32>
    %40 = vector.shape_cast %39 : vector<1x8x128xf32> to vector<8x128xf32>
    %41 = vector.shape_cast %38 : vector<8x128xf32> to vector<1x8x128xf32>
    tpu.vector_store %arg11[%c3_23, %c0_24, %c0_25], %41 {strides = array<i32>} : memref<8x8x128xf32, #tpu.memory_space<vmem>>, vector<1x8x128xf32>,
    %42 = vector.extract_strided_slice %5 {offsets = [32, 0], sizes = [8, 256], strides = [1, 1]} : vector<64x256xf32> to vector<8x256xf32>
    %43 = vector.extract_strided_slice %42 {offsets = [0, 0], sizes = [8, 128], strides = [1, 1]} : vector<8x256xf32> to vector<8x128xf32>
    %c4 = arith.constant 4 : index
    %c0_26 = arith.constant 0 : index
    %c0_27 = arith.constant 0 : index
    %44 = vector.load %arg10[%c4, %c0_26, %c0_27] : memref<8x8x128xf32, #tpu.memory_space<vmem>>, vector<1x8x128xf32>
    %45 = vector.shape_cast %44 : vector<1x8x128xf32> to vector<8x128xf32>
    %46 = vector.shape_cast %43 : vector<8x128xf32> to vector<1x8x128xf32>
    tpu.vector_store %arg10[%c4, %c0_26, %c0_27], %46 {strides = array<i32>} : memref<8x8x128xf32, #tpu.memory_space<vmem>>, vector<1x8x128xf32>,
    %47 = vector.extract_strided_slice %42 {offsets = [0, 128], sizes = [8, 128], strides = [1, 1]} : vector<8x256xf32> to vector<8x128xf32>
    %c4_28 = arith.constant 4 : index
    %c0_29 = arith.constant 0 : index
    %c0_30 = arith.constant 0 : index
    %48 = vector.load %arg11[%c4_28, %c0_29, %c0_30] : memref<8x8x128xf32, #tpu.memory_space<vmem>>, vector<1x8x128xf32>
    %49 = vector.shape_cast %48 : vector<1x8x128xf32> to vector<8x128xf32>
    %50 = vector.shape_cast %47 : vector<8x128xf32> to vector<1x8x128xf32>
    tpu.vector_store %arg11[%c4_28, %c0_29, %c0_30], %50 {strides = array<i32>} : memref<8x8x128xf32, #tpu.memory_space<vmem>>, vector<1x8x128xf32>,
    %51 = vector.extract_strided_slice %5 {offsets = [40, 0], sizes = [8, 256], strides = [1, 1]} : vector<64x256xf32> to vector<8x256xf32>
    %52 = vector.extract_strided_slice %51 {offsets = [0, 0], sizes = [8, 128], strides = [1, 1]} : vector<8x256xf32> to vector<8x128xf32>
    %c5 = arith.constant 5 : index
    %c0_31 = arith.constant 0 : index
    %c0_32 = arith.constant 0 : index
    %53 = vector.load %arg10[%c5, %c0_31, %c0_32] : memref<8x8x128xf32, #tpu.memory_space<vmem>>, vector<1x8x128xf32>
    %54 = vector.shape_cast %53 : vector<1x8x128xf32> to vector<8x128xf32>
    %55 = vector.shape_cast %52 : vector<8x128xf32> to vector<1x8x128xf32>
    tpu.vector_store %arg10[%c5, %c0_31, %c0_32], %55 {strides = array<i32>} : memref<8x8x128xf32, #tpu.memory_space<vmem>>, vector<1x8x128xf32>,
    %56 = vector.extract_strided_slice %51 {offsets = [0, 128], sizes = [8, 128], strides = [1, 1]} : vector<8x256xf32> to vector<8x128xf32>
    %c5_33 = arith.constant 5 : index
    %c0_34 = arith.constant 0 : index
    %c0_35 = arith.constant 0 : index
    %57 = vector.load %arg11[%c5_33, %c0_34, %c0_35] : memref<8x8x128xf32, #tpu.memory_space<vmem>>, vector<1x8x128xf32>
    %58 = vector.shape_cast %57 : vector<1x8x128xf32> to vector<8x128xf32>
    %59 = vector.shape_cast %56 : vector<8x128xf32> to vector<1x8x128xf32>
    tpu.vector_store %arg11[%c5_33, %c0_34, %c0_35], %59 {strides = array<i32>} : memref<8x8x128xf32, #tpu.memory_space<vmem>>, vector<1x8x128xf32>,
    %60 = vector.extract_strided_slice %5 {offsets = [48, 0], sizes = [8, 256], strides = [1, 1]} : vector<64x256xf32> to vector<8x256xf32>
    %61 = vector.extract_strided_slice %60 {offsets = [0, 0], sizes = [8, 128], strides = [1, 1]} : vector<8x256xf32> to vector<8x128xf32>
    %c6 = arith.constant 6 : index
    %c0_36 = arith.constant 0 : index
    %c0_37 = arith.constant 0 : index
    %62 = vector.load %arg10[%c6, %c0_36, %c0_37] : memref<8x8x128xf32, #tpu.memory_space<vmem>>, vector<1x8x128xf32>
    %63 = vector.shape_cast %62 : vector<1x8x128xf32> to vector<8x128xf32>
    %64 = vector.shape_cast %61 : vector<8x128xf32> to vector<1x8x128xf32>
    tpu.vector_store %arg10[%c6, %c0_36, %c0_37], %64 {strides = array<i32>} : memref<8x8x128xf32, #tpu.memory_space<vmem>>, vector<1x8x128xf32>,
    %65 = vector.extract_strided_slice %60 {offsets = [0, 128], sizes = [8, 128], strides = [1, 1]} : vector<8x256xf32> to vector<8x128xf32>
    %c6_38 = arith.constant 6 : index
    %c0_39 = arith.constant 0 : index
    %c0_40 = arith.constant 0 : index
    %66 = vector.load %arg11[%c6_38, %c0_39, %c0_40] : memref<8x8x128xf32, #tpu.memory_space<vmem>>, vector<1x8x128xf32>
    %67 = vector.shape_cast %66 : vector<1x8x128xf32> to vector<8x128xf32>
    %68 = vector.shape_cast %65 : vector<8x128xf32> to vector<1x8x128xf32>
    tpu.vector_store %arg11[%c6_38, %c0_39, %c0_40], %68 {strides = array<i32>} : memref<8x8x128xf32, #tpu.memory_space<vmem>>, vector<1x8x128xf32>,
    %69 = vector.extract_strided_slice %5 {offsets = [56, 0], sizes = [8, 256], strides = [1, 1]} : vector<64x256xf32> to vector<8x256xf32>
    %70 = vector.extract_strided_slice %69 {offsets = [0, 0], sizes = [8, 128], strides = [1, 1]} : vector<8x256xf32> to vector<8x128xf32>
    %c7 = arith.constant 7 : index
    %c0_41 = arith.constant 0 : index
    %c0_42 = arith.constant 0 : index
    %71 = vector.load %arg10[%c7, %c0_41, %c0_42] : memref<8x8x128xf32, #tpu.memory_space<vmem>>, vector<1x8x128xf32>
    %72 = vector.shape_cast %71 : vector<1x8x128xf32> to vector<8x128xf32>
    %73 = vector.shape_cast %70 : vector<8x128xf32> to vector<1x8x128xf32>
    tpu.vector_store %arg10[%c7, %c0_41, %c0_42], %73 {strides = array<i32>} : memref<8x8x128xf32, #tpu.memory_space<vmem>>, vector<1x8x128xf32>,
    %74 = vector.extract_strided_slice %69 {offsets = [0, 128], sizes = [8, 128], strides = [1, 1]} : vector<8x256xf32> to vector<8x128xf32>
    %c7_43 = arith.constant 7 : index
    %c0_44 = arith.constant 0 : index
    %c0_45 = arith.constant 0 : index
    %75 = vector.load %arg11[%c7_43, %c0_44, %c0_45] : memref<8x8x128xf32, #tpu.memory_space<vmem>>, vector<1x8x128xf32>
    %76 = vector.shape_cast %75 : vector<1x8x128xf32> to vector<8x128xf32>
    %77 = vector.shape_cast %74 : vector<8x128xf32> to vector<1x8x128xf32>
    tpu.vector_store %arg11[%c7_43, %c0_44, %c0_45], %77 {strides = array<i32>} : memref<8x8x128xf32, #tpu.memory_space<vmem>>, vector<1x8x128xf32>,
    %c0_46 = arith.constant 0 : index
    %c0_47 = arith.constant 0 : index
    %78 = vector.load %arg3[%c0_46, %c0_47] : memref<32x128xf32, #tpu.memory_space<vmem>>, vector<32x128xf32>
    %c0_48 = arith.constant 0 : index
    %c0_49 = arith.constant 0 : index
    %79 = vector.load %arg4[%c0_48, %c0_49] : memref<32x128xf32, #tpu.memory_space<vmem>>, vector<32x128xf32>
    %cst_50 = arith.constant 0.000000e+00 : f32
    %80 = vector.broadcast %cst_50 : f32 to vector<8x32xf32>
    %c0_51 = arith.constant 0 : index
    %c0_52 = arith.constant 0 : index
    %c0_53 = arith.constant 0 : index
    %81 = vector.load %arg10[%c0_51, %c0_52, %c0_53] : memref<8x8x128xf32, #tpu.memory_space<vmem>>, vector<1x8x128xf32>
    %82 = vector.shape_cast %81 : vector<1x8x128xf32> to vector<8x128xf32>
    %83 = vector.extract_strided_slice %82 {offsets = [0, 0], sizes = [8, 96], strides = [1, 1]} : vector<8x128xf32> to vector<8x96xf32>
    %84 = arith.negf %83 : vector<8x96xf32>
    %85 = math.exp %84 : vector<8x96xf32>
    %cst_54 = arith.constant 1.000000e+00 : f32
    %86 = vector.broadcast %cst_54 : f32 to vector<8x96xf32>
    %87 = arith.addf %86, %85 : vector<8x96xf32>
    %88 = arith.divf %86, %87 : vector<8x96xf32>
    %89 = vector.extract_strided_slice %88 {offsets = [0, 0], sizes = [8, 32], strides = [1, 1]} : vector<8x96xf32> to vector<8x32xf32>
    %90 = vector.extract_strided_slice %88 {offsets = [0, 32], sizes = [8, 32], strides = [1, 1]} : vector<8x96xf32> to vector<8x32xf32>
    %91 = vector.extract_strided_slice %88 {offsets = [0, 64], sizes = [8, 32], strides = [1, 1]} : vector<8x96xf32> to vector<8x32xf32>
    %92 = vector.extract_strided_slice %82 {offsets = [0, 96], sizes = [8, 32], strides = [1, 1]} : vector<8x128xf32> to vector<8x32xf32>
    %93 = math.tanh %92 : vector<8x32xf32>
    %94 = arith.mulf %90, %80 : vector<8x32xf32>
    %95 = arith.mulf %89, %93 : vector<8x32xf32>
    %96 = arith.addf %94, %95 : vector<8x32xf32>
    %97 = math.tanh %96 : vector<8x32xf32>
    %98 = arith.mulf %91, %97 : vector<8x32xf32>
    %c7_55 = arith.constant 7 : index
    %c0_56 = arith.constant 0 : index
    %c0_57 = arith.constant 0 : index
    %99 = vector.load %arg11[%c7_55, %c0_56, %c0_57] : memref<8x8x128xf32, #tpu.memory_space<vmem>>, vector<1x8x128xf32>
    %100 = vector.shape_cast %99 : vector<1x8x128xf32> to vector<8x128xf32>
    %101 = vector.extract_strided_slice %100 {offsets = [0, 0], sizes = [8, 96], strides = [1, 1]} : vector<8x128xf32> to vector<8x96xf32>
    %102 = arith.negf %101 : vector<8x96xf32>
    %103 = math.exp %102 : vector<8x96xf32>
    %cst_58 = arith.constant 1.000000e+00 : f32
    %104 = vector.broadcast %cst_58 : f32 to vector<8x96xf32>
    %105 = arith.addf %104, %103 : vector<8x96xf32>
    %106 = arith.divf %104, %105 : vector<8x96xf32>
    %107 = vector.extract_strided_slice %106 {offsets = [0, 0], sizes = [8, 32], strides = [1, 1]} : vector<8x96xf32> to vector<8x32xf32>
    %108 = vector.extract_strided_slice %106 {offsets = [0, 32], sizes = [8, 32], strides = [1, 1]} : vector<8x96xf32> to vector<8x32xf32>
    %109 = vector.extract_strided_slice %106 {offsets = [0, 64], sizes = [8, 32], strides = [1, 1]} : vector<8x96xf32> to vector<8x32xf32>
    %110 = vector.extract_strided_slice %100 {offsets = [0, 96], sizes = [8, 32], strides = [1, 1]} : vector<8x128xf32> to vector<8x32xf32>
    %111 = math.tanh %110 : vector<8x32xf32>
    %112 = arith.mulf %108, %80 : vector<8x32xf32>
    %113 = arith.mulf %107, %111 : vector<8x32xf32>
    %114 = arith.addf %112, %113 : vector<8x32xf32>
    %115 = math.tanh %114 : vector<8x32xf32>
    %116 = arith.mulf %109, %115 : vector<8x32xf32>
    %c1_i32 = arith.constant 1 : i32
    %117 = arith.index_cast %c1_i32 : i32 to index
    %c0_59 = arith.constant 0 : index
    %c0_60 = arith.constant 0 : index
    %118 = vector.load %arg10[%117, %c0_59, %c0_60] : memref<8x8x128xf32, #tpu.memory_space<vmem>>, vector<1x8x128xf32>
    %119 = vector.shape_cast %118 : vector<1x8x128xf32> to vector<8x128xf32>
    %cst_61 = arith.constant dense<0.000000e+00> : vector<8x128xf32>
    %120 = tpu.matmul %98, %78, %cst_61 {dimension_numbers = #tpu.dot_dimension_numbers<[1], [0], [0], [1], [0, 0, 1, 1], [], []>} : vector<8x32xf32>, vector<32x128xf32>, vector<8x128xf32> -> vector<8x128xf32>
    %121 = arith.addf %119, %120 : vector<8x128xf32>
    %c7_i32 = arith.constant 7 : i32
    %122 = arith.subi %c7_i32, %c1_i32 : i32
    %123 = arith.index_cast %122 : i32 to index
    %c0_62 = arith.constant 0 : index
    %c0_63 = arith.constant 0 : index
    %124 = vector.load %arg11[%123, %c0_62, %c0_63] : memref<8x8x128xf32, #tpu.memory_space<vmem>>, vector<1x8x128xf32>
    %125 = vector.shape_cast %124 : vector<1x8x128xf32> to vector<8x128xf32>
    %cst_64 = arith.constant dense<0.000000e+00> : vector<8x128xf32>
    %126 = tpu.matmul %116, %79, %cst_64 {dimension_numbers = #tpu.dot_dimension_numbers<[1], [0], [0], [1], [0, 0, 1, 1], [], []>} : vector<8x32xf32>, vector<32x128xf32>, vector<8x128xf32> -> vector<8x128xf32>
    %127 = arith.addf %125, %126 : vector<8x128xf32>
    %128 = vector.extract_strided_slice %121 {offsets = [0, 0], sizes = [8, 96], strides = [1, 1]} : vector<8x128xf32> to vector<8x96xf32>
    %129 = arith.negf %128 : vector<8x96xf32>
    %130 = math.exp %129 : vector<8x96xf32>
    %cst_65 = arith.constant 1.000000e+00 : f32
    %131 = vector.broadcast %cst_65 : f32 to vector<8x96xf32>
    %132 = arith.addf %131, %130 : vector<8x96xf32>
    %133 = arith.divf %131, %132 : vector<8x96xf32>
    %134 = vector.extract_strided_slice %133 {offsets = [0, 0], sizes = [8, 32], strides = [1, 1]} : vector<8x96xf32> to vector<8x32xf32>
    %135 = vector.extract_strided_slice %133 {offsets = [0, 32], sizes = [8, 32], strides = [1, 1]} : vector<8x96xf32> to vector<8x32xf32>
    %136 = vector.extract_strided_slice %133 {offsets = [0, 64], sizes = [8, 32], strides = [1, 1]} : vector<8x96xf32> to vector<8x32xf32>
    %137 = vector.extract_strided_slice %121 {offsets = [0, 96], sizes = [8, 32], strides = [1, 1]} : vector<8x128xf32> to vector<8x32xf32>
    %138 = math.tanh %137 : vector<8x32xf32>
    %139 = arith.mulf %135, %96 : vector<8x32xf32>
    %140 = arith.mulf %134, %138 : vector<8x32xf32>
    %141 = arith.addf %139, %140 : vector<8x32xf32>
    %142 = math.tanh %141 : vector<8x32xf32>
    %143 = arith.mulf %136, %142 : vector<8x32xf32>
    %144 = vector.extract_strided_slice %127 {offsets = [0, 0], sizes = [8, 96], strides = [1, 1]} : vector<8x128xf32> to vector<8x96xf32>
    %145 = arith.negf %144 : vector<8x96xf32>
    %146 = math.exp %145 : vector<8x96xf32>
    %cst_66 = arith.constant 1.000000e+00 : f32
    %147 = vector.broadcast %cst_66 : f32 to vector<8x96xf32>
    %148 = arith.addf %147, %146 : vector<8x96xf32>
    %149 = arith.divf %147, %148 : vector<8x96xf32>
    %150 = vector.extract_strided_slice %149 {offsets = [0, 0], sizes = [8, 32], strides = [1, 1]} : vector<8x96xf32> to vector<8x32xf32>
    %151 = vector.extract_strided_slice %149 {offsets = [0, 32], sizes = [8, 32], strides = [1, 1]} : vector<8x96xf32> to vector<8x32xf32>
    %152 = vector.extract_strided_slice %149 {offsets = [0, 64], sizes = [8, 32], strides = [1, 1]} : vector<8x96xf32> to vector<8x32xf32>
    %153 = vector.extract_strided_slice %127 {offsets = [0, 96], sizes = [8, 32], strides = [1, 1]} : vector<8x128xf32> to vector<8x32xf32>
    %154 = math.tanh %153 : vector<8x32xf32>
    %155 = arith.mulf %151, %114 : vector<8x32xf32>
    %156 = arith.mulf %150, %154 : vector<8x32xf32>
    %157 = arith.addf %155, %156 : vector<8x32xf32>
    %158 = math.tanh %157 : vector<8x32xf32>
    %159 = arith.mulf %152, %158 : vector<8x32xf32>
    %160 = arith.addf %98, %143 : vector<8x32xf32>
    %161 = arith.addf %116, %159 : vector<8x32xf32>
    %162 = arith.maximumf %98, %143 : vector<8x32xf32>
    %163 = arith.maximumf %116, %159 : vector<8x32xf32>
    %c2_i32 = arith.constant 2 : i32
    %164 = arith.index_cast %c2_i32 : i32 to index
    %c0_67 = arith.constant 0 : index
    %c0_68 = arith.constant 0 : index
    %165 = vector.load %arg10[%164, %c0_67, %c0_68] : memref<8x8x128xf32, #tpu.memory_space<vmem>>, vector<1x8x128xf32>
    %166 = vector.shape_cast %165 : vector<1x8x128xf32> to vector<8x128xf32>
    %cst_69 = arith.constant dense<0.000000e+00> : vector<8x128xf32>
    %167 = tpu.matmul %143, %78, %cst_69 {dimension_numbers = #tpu.dot_dimension_numbers<[1], [0], [0], [1], [0, 0, 1, 1], [], []>} : vector<8x32xf32>, vector<32x128xf32>, vector<8x128xf32> -> vector<8x128xf32>
    %168 = arith.addf %166, %167 : vector<8x128xf32>
    %c7_i32_70 = arith.constant 7 : i32
    %169 = arith.subi %c7_i32_70, %c2_i32 : i32
    %170 = arith.index_cast %169 : i32 to index
    %c0_71 = arith.constant 0 : index
    %c0_72 = arith.constant 0 : index
    %171 = vector.load %arg11[%170, %c0_71, %c0_72] : memref<8x8x128xf32, #tpu.memory_space<vmem>>, vector<1x8x128xf32>
    %172 = vector.shape_cast %171 : vector<1x8x128xf32> to vector<8x128xf32>
    %cst_73 = arith.constant dense<0.000000e+00> : vector<8x128xf32>
    %173 = tpu.matmul %159, %79, %cst_73 {dimension_numbers = #tpu.dot_dimension_numbers<[1], [0], [0], [1], [0, 0, 1, 1], [], []>} : vector<8x32xf32>, vector<32x128xf32>, vector<8x128xf32> -> vector<8x128xf32>
    %174 = arith.addf %172, %173 : vector<8x128xf32>
    %175 = vector.extract_strided_slice %168 {offsets = [0, 0], sizes = [8, 96], strides = [1, 1]} : vector<8x128xf32> to vector<8x96xf32>
    %176 = arith.negf %175 : vector<8x96xf32>
    %177 = math.exp %176 : vector<8x96xf32>
    %cst_74 = arith.constant 1.000000e+00 : f32
    %178 = vector.broadcast %cst_74 : f32 to vector<8x96xf32>
    %179 = arith.addf %178, %177 : vector<8x96xf32>
    %180 = arith.divf %178, %179 : vector<8x96xf32>
    %181 = vector.extract_strided_slice %180 {offsets = [0, 0], sizes = [8, 32], strides = [1, 1]} : vector<8x96xf32> to vector<8x32xf32>
    %182 = vector.extract_strided_slice %180 {offsets = [0, 32], sizes = [8, 32], strides = [1, 1]} : vector<8x96xf32> to vector<8x32xf32>
    %183 = vector.extract_strided_slice %180 {offsets = [0, 64], sizes = [8, 32], strides = [1, 1]} : vector<8x96xf32> to vector<8x32xf32>
    %184 = vector.extract_strided_slice %168 {offsets = [0, 96], sizes = [8, 32], strides = [1, 1]} : vector<8x128xf32> to vector<8x32xf32>
    %185 = math.tanh %184 : vector<8x32xf32>
    %186 = arith.mulf %182, %141 : vector<8x32xf32>
    %187 = arith.mulf %181, %185 : vector<8x32xf32>
    %188 = arith.addf %186, %187 : vector<8x32xf32>
    %189 = math.tanh %188 : vector<8x32xf32>
    %190 = arith.mulf %183, %189 : vector<8x32xf32>
    %191 = vector.extract_strided_slice %174 {offsets = [0, 0], sizes = [8, 96], strides = [1, 1]} : vector<8x128xf32> to vector<8x96xf32>
    %192 = arith.negf %191 : vector<8x96xf32>
    %193 = math.exp %192 : vector<8x96xf32>
    %cst_75 = arith.constant 1.000000e+00 : f32
    %194 = vector.broadcast %cst_75 : f32 to vector<8x96xf32>
    %195 = arith.addf %194, %193 : vector<8x96xf32>
    %196 = arith.divf %194, %195 : vector<8x96xf32>
    %197 = vector.extract_strided_slice %196 {offsets = [0, 0], sizes = [8, 32], strides = [1, 1]} : vector<8x96xf32> to vector<8x32xf32>
    %198 = vector.extract_strided_slice %196 {offsets = [0, 32], sizes = [8, 32], strides = [1, 1]} : vector<8x96xf32> to vector<8x32xf32>
    %199 = vector.extract_strided_slice %196 {offsets = [0, 64], sizes = [8, 32], strides = [1, 1]} : vector<8x96xf32> to vector<8x32xf32>
    %200 = vector.extract_strided_slice %174 {offsets = [0, 96], sizes = [8, 32], strides = [1, 1]} : vector<8x128xf32> to vector<8x32xf32>
    %201 = math.tanh %200 : vector<8x32xf32>
    %202 = arith.mulf %198, %157 : vector<8x32xf32>
    %203 = arith.mulf %197, %201 : vector<8x32xf32>
    %204 = arith.addf %202, %203 : vector<8x32xf32>
    %205 = math.tanh %204 : vector<8x32xf32>
    %206 = arith.mulf %199, %205 : vector<8x32xf32>
    %207 = arith.addf %160, %190 : vector<8x32xf32>
    %208 = arith.addf %161, %206 : vector<8x32xf32>
    %209 = arith.maximumf %162, %190 : vector<8x32xf32>
    %210 = arith.maximumf %163, %206 : vector<8x32xf32>
    %c3_i32 = arith.constant 3 : i32
    %211 = arith.index_cast %c3_i32 : i32 to index
    %c0_76 = arith.constant 0 : index
    %c0_77 = arith.constant 0 : index
    %212 = vector.load %arg10[%211, %c0_76, %c0_77] : memref<8x8x128xf32, #tpu.memory_space<vmem>>, vector<1x8x128xf32>
    %213 = vector.shape_cast %212 : vector<1x8x128xf32> to vector<8x128xf32>
    %cst_78 = arith.constant dense<0.000000e+00> : vector<8x128xf32>
    %214 = tpu.matmul %190, %78, %cst_78 {dimension_numbers = #tpu.dot_dimension_numbers<[1], [0], [0], [1], [0, 0, 1, 1], [], []>} : vector<8x32xf32>, vector<32x128xf32>, vector<8x128xf32> -> vector<8x128xf32>
    %215 = arith.addf %213, %214 : vector<8x128xf32>
    %c7_i32_79 = arith.constant 7 : i32
    %216 = arith.subi %c7_i32_79, %c3_i32 : i32
    %217 = arith.index_cast %216 : i32 to index
    %c0_80 = arith.constant 0 : index
    %c0_81 = arith.constant 0 : index
    %218 = vector.load %arg11[%217, %c0_80, %c0_81] : memref<8x8x128xf32, #tpu.memory_space<vmem>>, vector<1x8x128xf32>
    %219 = vector.shape_cast %218 : vector<1x8x128xf32> to vector<8x128xf32>
    %cst_82 = arith.constant dense<0.000000e+00> : vector<8x128xf32>
    %220 = tpu.matmul %206, %79, %cst_82 {dimension_numbers = #tpu.dot_dimension_numbers<[1], [0], [0], [1], [0, 0, 1, 1], [], []>} : vector<8x32xf32>, vector<32x128xf32>, vector<8x128xf32> -> vector<8x128xf32>
    %221 = arith.addf %219, %220 : vector<8x128xf32>
    %222 = vector.extract_strided_slice %215 {offsets = [0, 0], sizes = [8, 96], strides = [1, 1]} : vector<8x128xf32> to vector<8x96xf32>
    %223 = arith.negf %222 : vector<8x96xf32>
    %224 = math.exp %223 : vector<8x96xf32>
    %cst_83 = arith.constant 1.000000e+00 : f32
    %225 = vector.broadcast %cst_83 : f32 to vector<8x96xf32>
    %226 = arith.addf %225, %224 : vector<8x96xf32>
    %227 = arith.divf %225, %226 : vector<8x96xf32>
    %228 = vector.extract_strided_slice %227 {offsets = [0, 0], sizes = [8, 32], strides = [1, 1]} : vector<8x96xf32> to vector<8x32xf32>
    %229 = vector.extract_strided_slice %227 {offsets = [0, 32], sizes = [8, 32], strides = [1, 1]} : vector<8x96xf32> to vector<8x32xf32>
    %230 = vector.extract_strided_slice %227 {offsets = [0, 64], sizes = [8, 32], strides = [1, 1]} : vector<8x96xf32> to vector<8x32xf32>
    %231 = vector.extract_strided_slice %215 {offsets = [0, 96], sizes = [8, 32], strides = [1, 1]} : vector<8x128xf32> to vector<8x32xf32>
    %232 = math.tanh %231 : vector<8x32xf32>
    %233 = arith.mulf %229, %188 : vector<8x32xf32>
    %234 = arith.mulf %228, %232 : vector<8x32xf32>
    %235 = arith.addf %233, %234 : vector<8x32xf32>
    %236 = math.tanh %235 : vector<8x32xf32>
    %237 = arith.mulf %230, %236 : vector<8x32xf32>
    %238 = vector.extract_strided_slice %221 {offsets = [0, 0], sizes = [8, 96], strides = [1, 1]} : vector<8x128xf32> to vector<8x96xf32>
    %239 = arith.negf %238 : vector<8x96xf32>
    %240 = math.exp %239 : vector<8x96xf32>
    %cst_84 = arith.constant 1.000000e+00 : f32
    %241 = vector.broadcast %cst_84 : f32 to vector<8x96xf32>
    %242 = arith.addf %241, %240 : vector<8x96xf32>
    %243 = arith.divf %241, %242 : vector<8x96xf32>
    %244 = vector.extract_strided_slice %243 {offsets = [0, 0], sizes = [8, 32], strides = [1, 1]} : vector<8x96xf32> to vector<8x32xf32>
    %245 = vector.extract_strided_slice %243 {offsets = [0, 32], sizes = [8, 32], strides = [1, 1]} : vector<8x96xf32> to vector<8x32xf32>
    %246 = vector.extract_strided_slice %243 {offsets = [0, 64], sizes = [8, 32], strides = [1, 1]} : vector<8x96xf32> to vector<8x32xf32>
    %247 = vector.extract_strided_slice %221 {offsets = [0, 96], sizes = [8, 32], strides = [1, 1]} : vector<8x128xf32> to vector<8x32xf32>
    %248 = math.tanh %247 : vector<8x32xf32>
    %249 = arith.mulf %245, %204 : vector<8x32xf32>
    %250 = arith.mulf %244, %248 : vector<8x32xf32>
    %251 = arith.addf %249, %250 : vector<8x32xf32>
    %252 = math.tanh %251 : vector<8x32xf32>
    %253 = arith.mulf %246, %252 : vector<8x32xf32>
    %254 = arith.addf %207, %237 : vector<8x32xf32>
    %255 = arith.addf %208, %253 : vector<8x32xf32>
    %256 = arith.maximumf %209, %237 : vector<8x32xf32>
    %257 = arith.maximumf %210, %253 : vector<8x32xf32>
    %c4_i32 = arith.constant 4 : i32
    %258 = arith.index_cast %c4_i32 : i32 to index
    %c0_85 = arith.constant 0 : index
    %c0_86 = arith.constant 0 : index
    %259 = vector.load %arg10[%258, %c0_85, %c0_86] : memref<8x8x128xf32, #tpu.memory_space<vmem>>, vector<1x8x128xf32>
    %260 = vector.shape_cast %259 : vector<1x8x128xf32> to vector<8x128xf32>
    %cst_87 = arith.constant dense<0.000000e+00> : vector<8x128xf32>
    %261 = tpu.matmul %237, %78, %cst_87 {dimension_numbers = #tpu.dot_dimension_numbers<[1], [0], [0], [1], [0, 0, 1, 1], [], []>} : vector<8x32xf32>, vector<32x128xf32>, vector<8x128xf32> -> vector<8x128xf32>
    %262 = arith.addf %260, %261 : vector<8x128xf32>
    %c7_i32_88 = arith.constant 7 : i32
    %263 = arith.subi %c7_i32_88, %c4_i32 : i32
    %264 = arith.index_cast %263 : i32 to index
    %c0_89 = arith.constant 0 : index
    %c0_90 = arith.constant 0 : index
    %265 = vector.load %arg11[%264, %c0_89, %c0_90] : memref<8x8x128xf32, #tpu.memory_space<vmem>>, vector<1x8x128xf32>
    %266 = vector.shape_cast %265 : vector<1x8x128xf32> to vector<8x128xf32>
    %cst_91 = arith.constant dense<0.000000e+00> : vector<8x128xf32>
    %267 = tpu.matmul %253, %79, %cst_91 {dimension_numbers = #tpu.dot_dimension_numbers<[1], [0], [0], [1], [0, 0, 1, 1], [], []>} : vector<8x32xf32>, vector<32x128xf32>, vector<8x128xf32> -> vector<8x128xf32>
    %268 = arith.addf %266, %267 : vector<8x128xf32>
    %269 = vector.extract_strided_slice %262 {offsets = [0, 0], sizes = [8, 96], strides = [1, 1]} : vector<8x128xf32> to vector<8x96xf32>
    %270 = arith.negf %269 : vector<8x96xf32>
    %271 = math.exp %270 : vector<8x96xf32>
    %cst_92 = arith.constant 1.000000e+00 : f32
    %272 = vector.broadcast %cst_92 : f32 to vector<8x96xf32>
    %273 = arith.addf %272, %271 : vector<8x96xf32>
    %274 = arith.divf %272, %273 : vector<8x96xf32>
    %275 = vector.extract_strided_slice %274 {offsets = [0, 0], sizes = [8, 32], strides = [1, 1]} : vector<8x96xf32> to vector<8x32xf32>
    %276 = vector.extract_strided_slice %274 {offsets = [0, 32], sizes = [8, 32], strides = [1, 1]} : vector<8x96xf32> to vector<8x32xf32>
    %277 = vector.extract_strided_slice %274 {offsets = [0, 64], sizes = [8, 32], strides = [1, 1]} : vector<8x96xf32> to vector<8x32xf32>
    %278 = vector.extract_strided_slice %262 {offsets = [0, 96], sizes = [8, 32], strides = [1, 1]} : vector<8x128xf32> to vector<8x32xf32>
    %279 = math.tanh %278 : vector<8x32xf32>
    %280 = arith.mulf %276, %235 : vector<8x32xf32>
    %281 = arith.mulf %275, %279 : vector<8x32xf32>
    %282 = arith.addf %280, %281 : vector<8x32xf32>
    %283 = math.tanh %282 : vector<8x32xf32>
    %284 = arith.mulf %277, %283 : vector<8x32xf32>
    %285 = vector.extract_strided_slice %268 {offsets = [0, 0], sizes = [8, 96], strides = [1, 1]} : vector<8x128xf32> to vector<8x96xf32>
    %286 = arith.negf %285 : vector<8x96xf32>
    %287 = math.exp %286 : vector<8x96xf32>
    %cst_93 = arith.constant 1.000000e+00 : f32
    %288 = vector.broadcast %cst_93 : f32 to vector<8x96xf32>
    %289 = arith.addf %288, %287 : vector<8x96xf32>
    %290 = arith.divf %288, %289 : vector<8x96xf32>
    %291 = vector.extract_strided_slice %290 {offsets = [0, 0], sizes = [8, 32], strides = [1, 1]} : vector<8x96xf32> to vector<8x32xf32>
    %292 = vector.extract_strided_slice %290 {offsets = [0, 32], sizes = [8, 32], strides = [1, 1]} : vector<8x96xf32> to vector<8x32xf32>
    %293 = vector.extract_strided_slice %290 {offsets = [0, 64], sizes = [8, 32], strides = [1, 1]} : vector<8x96xf32> to vector<8x32xf32>
    %294 = vector.extract_strided_slice %268 {offsets = [0, 96], sizes = [8, 32], strides = [1, 1]} : vector<8x128xf32> to vector<8x32xf32>
    %295 = math.tanh %294 : vector<8x32xf32>
    %296 = arith.mulf %292, %251 : vector<8x32xf32>
    %297 = arith.mulf %291, %295 : vector<8x32xf32>
    %298 = arith.addf %296, %297 : vector<8x32xf32>
    %299 = math.tanh %298 : vector<8x32xf32>
    %300 = arith.mulf %293, %299 : vector<8x32xf32>
    %301 = arith.addf %254, %284 : vector<8x32xf32>
    %302 = arith.addf %255, %300 : vector<8x32xf32>
    %303 = arith.maximumf %256, %284 : vector<8x32xf32>
    %304 = arith.maximumf %257, %300 : vector<8x32xf32>
    %c5_i32 = arith.constant 5 : i32
    %305 = arith.index_cast %c5_i32 : i32 to index
    %c0_94 = arith.constant 0 : index
    %c0_95 = arith.constant 0 : index
    %306 = vector.load %arg10[%305, %c0_94, %c0_95] : memref<8x8x128xf32, #tpu.memory_space<vmem>>, vector<1x8x128xf32>
    %307 = vector.shape_cast %306 : vector<1x8x128xf32> to vector<8x128xf32>
    %cst_96 = arith.constant dense<0.000000e+00> : vector<8x128xf32>
    %308 = tpu.matmul %284, %78, %cst_96 {dimension_numbers = #tpu.dot_dimension_numbers<[1], [0], [0], [1], [0, 0, 1, 1], [], []>} : vector<8x32xf32>, vector<32x128xf32>, vector<8x128xf32> -> vector<8x128xf32>
    %309 = arith.addf %307, %308 : vector<8x128xf32>
    %c7_i32_97 = arith.constant 7 : i32
    %310 = arith.subi %c7_i32_97, %c5_i32 : i32
    %311 = arith.index_cast %310 : i32 to index
    %c0_98 = arith.constant 0 : index
    %c0_99 = arith.constant 0 : index
    %312 = vector.load %arg11[%311, %c0_98, %c0_99] : memref<8x8x128xf32, #tpu.memory_space<vmem>>, vector<1x8x128xf32>
    %313 = vector.shape_cast %312 : vector<1x8x128xf32> to vector<8x128xf32>
    %cst_100 = arith.constant dense<0.000000e+00> : vector<8x128xf32>
    %314 = tpu.matmul %300, %79, %cst_100 {dimension_numbers = #tpu.dot_dimension_numbers<[1], [0], [0], [1], [0, 0, 1, 1], [], []>} : vector<8x32xf32>, vector<32x128xf32>, vector<8x128xf32> -> vector<8x128xf32>
    %315 = arith.addf %313, %314 : vector<8x128xf32>
    %316 = vector.extract_strided_slice %309 {offsets = [0, 0], sizes = [8, 96], strides = [1, 1]} : vector<8x128xf32> to vector<8x96xf32>
    %317 = arith.negf %316 : vector<8x96xf32>
    %318 = math.exp %317 : vector<8x96xf32>
    %cst_101 = arith.constant 1.000000e+00 : f32
    %319 = vector.broadcast %cst_101 : f32 to vector<8x96xf32>
    %320 = arith.addf %319, %318 : vector<8x96xf32>
    %321 = arith.divf %319, %320 : vector<8x96xf32>
    %322 = vector.extract_strided_slice %321 {offsets = [0, 0], sizes = [8, 32], strides = [1, 1]} : vector<8x96xf32> to vector<8x32xf32>
    %323 = vector.extract_strided_slice %321 {offsets = [0, 32], sizes = [8, 32], strides = [1, 1]} : vector<8x96xf32> to vector<8x32xf32>
    %324 = vector.extract_strided_slice %321 {offsets = [0, 64], sizes = [8, 32], strides = [1, 1]} : vector<8x96xf32> to vector<8x32xf32>
    %325 = vector.extract_strided_slice %309 {offsets = [0, 96], sizes = [8, 32], strides = [1, 1]} : vector<8x128xf32> to vector<8x32xf32>
    %326 = math.tanh %325 : vector<8x32xf32>
    %327 = arith.mulf %323, %282 : vector<8x32xf32>
    %328 = arith.mulf %322, %326 : vector<8x32xf32>
    %329 = arith.addf %327, %328 : vector<8x32xf32>
    %330 = math.tanh %329 : vector<8x32xf32>
    %331 = arith.mulf %324, %330 : vector<8x32xf32>
    %332 = vector.extract_strided_slice %315 {offsets = [0, 0], sizes = [8, 96], strides = [1, 1]} : vector<8x128xf32> to vector<8x96xf32>
    %333 = arith.negf %332 : vector<8x96xf32>
    %334 = math.exp %333 : vector<8x96xf32>
    %cst_102 = arith.constant 1.000000e+00 : f32
    %335 = vector.broadcast %cst_102 : f32 to vector<8x96xf32>
    %336 = arith.addf %335, %334 : vector<8x96xf32>
    %337 = arith.divf %335, %336 : vector<8x96xf32>
    %338 = vector.extract_strided_slice %337 {offsets = [0, 0], sizes = [8, 32], strides = [1, 1]} : vector<8x96xf32> to vector<8x32xf32>
    %339 = vector.extract_strided_slice %337 {offsets = [0, 32], sizes = [8, 32], strides = [1, 1]} : vector<8x96xf32> to vector<8x32xf32>
    %340 = vector.extract_strided_slice %337 {offsets = [0, 64], sizes = [8, 32], strides = [1, 1]} : vector<8x96xf32> to vector<8x32xf32>
    %341 = vector.extract_strided_slice %315 {offsets = [0, 96], sizes = [8, 32], strides = [1, 1]} : vector<8x128xf32> to vector<8x32xf32>
    %342 = math.tanh %341 : vector<8x32xf32>
    %343 = arith.mulf %339, %298 : vector<8x32xf32>
    %344 = arith.mulf %338, %342 : vector<8x32xf32>
    %345 = arith.addf %343, %344 : vector<8x32xf32>
    %346 = math.tanh %345 : vector<8x32xf32>
    %347 = arith.mulf %340, %346 : vector<8x32xf32>
    %348 = arith.addf %301, %331 : vector<8x32xf32>
    %349 = arith.addf %302, %347 : vector<8x32xf32>
    %350 = arith.maximumf %303, %331 : vector<8x32xf32>
    %351 = arith.maximumf %304, %347 : vector<8x32xf32>
    %c6_i32 = arith.constant 6 : i32
    %352 = arith.index_cast %c6_i32 : i32 to index
    %c0_103 = arith.constant 0 : index
    %c0_104 = arith.constant 0 : index
    %353 = vector.load %arg10[%352, %c0_103, %c0_104] : memref<8x8x128xf32, #tpu.memory_space<vmem>>, vector<1x8x128xf32>
    %354 = vector.shape_cast %353 : vector<1x8x128xf32> to vector<8x128xf32>
    %cst_105 = arith.constant dense<0.000000e+00> : vector<8x128xf32>
    %355 = tpu.matmul %331, %78, %cst_105 {dimension_numbers = #tpu.dot_dimension_numbers<[1], [0], [0], [1], [0, 0, 1, 1], [], []>} : vector<8x32xf32>, vector<32x128xf32>, vector<8x128xf32> -> vector<8x128xf32>
    %356 = arith.addf %354, %355 : vector<8x128xf32>
    %c7_i32_106 = arith.constant 7 : i32
    %357 = arith.subi %c7_i32_106, %c6_i32 : i32
    %358 = arith.index_cast %357 : i32 to index
    %c0_107 = arith.constant 0 : index
    %c0_108 = arith.constant 0 : index
    %359 = vector.load %arg11[%358, %c0_107, %c0_108] : memref<8x8x128xf32, #tpu.memory_space<vmem>>, vector<1x8x128xf32>
    %360 = vector.shape_cast %359 : vector<1x8x128xf32> to vector<8x128xf32>
    %cst_109 = arith.constant dense<0.000000e+00> : vector<8x128xf32>
    %361 = tpu.matmul %347, %79, %cst_109 {dimension_numbers = #tpu.dot_dimension_numbers<[1], [0], [0], [1], [0, 0, 1, 1], [], []>} : vector<8x32xf32>, vector<32x128xf32>, vector<8x128xf32> -> vector<8x128xf32>
    %362 = arith.addf %360, %361 : vector<8x128xf32>
    %363 = vector.extract_strided_slice %356 {offsets = [0, 0], sizes = [8, 96], strides = [1, 1]} : vector<8x128xf32> to vector<8x96xf32>
    %364 = arith.negf %363 : vector<8x96xf32>
    %365 = math.exp %364 : vector<8x96xf32>
    %cst_110 = arith.constant 1.000000e+00 : f32
    %366 = vector.broadcast %cst_110 : f32 to vector<8x96xf32>
    %367 = arith.addf %366, %365 : vector<8x96xf32>
    %368 = arith.divf %366, %367 : vector<8x96xf32>
    %369 = vector.extract_strided_slice %368 {offsets = [0, 0], sizes = [8, 32], strides = [1, 1]} : vector<8x96xf32> to vector<8x32xf32>
    %370 = vector.extract_strided_slice %368 {offsets = [0, 32], sizes = [8, 32], strides = [1, 1]} : vector<8x96xf32> to vector<8x32xf32>
    %371 = vector.extract_strided_slice %368 {offsets = [0, 64], sizes = [8, 32], strides = [1, 1]} : vector<8x96xf32> to vector<8x32xf32>
    %372 = vector.extract_strided_slice %356 {offsets = [0, 96], sizes = [8, 32], strides = [1, 1]} : vector<8x128xf32> to vector<8x32xf32>
    %373 = math.tanh %372 : vector<8x32xf32>
    %374 = arith.mulf %370, %329 : vector<8x32xf32>
    %375 = arith.mulf %369, %373 : vector<8x32xf32>
    %376 = arith.addf %374, %375 : vector<8x32xf32>
    %377 = math.tanh %376 : vector<8x32xf32>
    %378 = arith.mulf %371, %377 : vector<8x32xf32>
    %379 = vector.extract_strided_slice %362 {offsets = [0, 0], sizes = [8, 96], strides = [1, 1]} : vector<8x128xf32> to vector<8x96xf32>
    %380 = arith.negf %379 : vector<8x96xf32>
    %381 = math.exp %380 : vector<8x96xf32>
    %cst_111 = arith.constant 1.000000e+00 : f32
    %382 = vector.broadcast %cst_111 : f32 to vector<8x96xf32>
    %383 = arith.addf %382, %381 : vector<8x96xf32>
    %384 = arith.divf %382, %383 : vector<8x96xf32>
    %385 = vector.extract_strided_slice %384 {offsets = [0, 0], sizes = [8, 32], strides = [1, 1]} : vector<8x96xf32> to vector<8x32xf32>
    %386 = vector.extract_strided_slice %384 {offsets = [0, 32], sizes = [8, 32], strides = [1, 1]} : vector<8x96xf32> to vector<8x32xf32>
    %387 = vector.extract_strided_slice %384 {offsets = [0, 64], sizes = [8, 32], strides = [1, 1]} : vector<8x96xf32> to vector<8x32xf32>
    %388 = vector.extract_strided_slice %362 {offsets = [0, 96], sizes = [8, 32], strides = [1, 1]} : vector<8x128xf32> to vector<8x32xf32>
    %389 = math.tanh %388 : vector<8x32xf32>
    %390 = arith.mulf %386, %345 : vector<8x32xf32>
    %391 = arith.mulf %385, %389 : vector<8x32xf32>
    %392 = arith.addf %390, %391 : vector<8x32xf32>
    %393 = math.tanh %392 : vector<8x32xf32>
    %394 = arith.mulf %387, %393 : vector<8x32xf32>
    %395 = arith.addf %348, %378 : vector<8x32xf32>
    %396 = arith.addf %349, %394 : vector<8x32xf32>
    %397 = arith.maximumf %350, %378 : vector<8x32xf32>
    %398 = arith.maximumf %351, %394 : vector<8x32xf32>
    %c7_i32_112 = arith.constant 7 : i32
    %399 = arith.index_cast %c7_i32_112 : i32 to index
    %c0_113 = arith.constant 0 : index
    %c0_114 = arith.constant 0 : index
    %400 = vector.load %arg10[%399, %c0_113, %c0_114] : memref<8x8x128xf32, #tpu.memory_space<vmem>>, vector<1x8x128xf32>
    %401 = vector.shape_cast %400 : vector<1x8x128xf32> to vector<8x128xf32>
    %cst_115 = arith.constant dense<0.000000e+00> : vector<8x128xf32>
    %402 = tpu.matmul %378, %78, %cst_115 {dimension_numbers = #tpu.dot_dimension_numbers<[1], [0], [0], [1], [0, 0, 1, 1], [], []>} : vector<8x32xf32>, vector<32x128xf32>, vector<8x128xf32> -> vector<8x128xf32>
    %403 = arith.addf %401, %402 : vector<8x128xf32>
    %c7_i32_116 = arith.constant 7 : i32
    %404 = arith.subi %c7_i32_116, %c7_i32_112 : i32
    %405 = arith.index_cast %404 : i32 to index
    %c0_117 = arith.constant 0 : index
    %c0_118 = arith.constant 0 : index
    %406 = vector.load %arg11[%405, %c0_117, %c0_118] : memref<8x8x128xf32, #tpu.memory_space<vmem>>, vector<1x8x128xf32>
    %407 = vector.shape_cast %406 : vector<1x8x128xf32> to vector<8x128xf32>
    %cst_119 = arith.constant dense<0.000000e+00> : vector<8x128xf32>
    %408 = tpu.matmul %394, %79, %cst_119 {dimension_numbers = #tpu.dot_dimension_numbers<[1], [0], [0], [1], [0, 0, 1, 1], [], []>} : vector<8x32xf32>, vector<32x128xf32>, vector<8x128xf32> -> vector<8x128xf32>
    %409 = arith.addf %407, %408 : vector<8x128xf32>
    %410 = vector.extract_strided_slice %403 {offsets = [0, 0], sizes = [8, 96], strides = [1, 1]} : vector<8x128xf32> to vector<8x96xf32>
    %411 = arith.negf %410 : vector<8x96xf32>
    %412 = math.exp %411 : vector<8x96xf32>
    %cst_120 = arith.constant 1.000000e+00 : f32
    %413 = vector.broadcast %cst_120 : f32 to vector<8x96xf32>
    %414 = arith.addf %413, %412 : vector<8x96xf32>
    %415 = arith.divf %413, %414 : vector<8x96xf32>
    %416 = vector.extract_strided_slice %415 {offsets = [0, 0], sizes = [8, 32], strides = [1, 1]} : vector<8x96xf32> to vector<8x32xf32>
    %417 = vector.extract_strided_slice %415 {offsets = [0, 32], sizes = [8, 32], strides = [1, 1]} : vector<8x96xf32> to vector<8x32xf32>
    %418 = vector.extract_strided_slice %415 {offsets = [0, 64], sizes = [8, 32], strides = [1, 1]} : vector<8x96xf32> to vector<8x32xf32>
    %419 = vector.extract_strided_slice %403 {offsets = [0, 96], sizes = [8, 32], strides = [1, 1]} : vector<8x128xf32> to vector<8x32xf32>
    %420 = math.tanh %419 : vector<8x32xf32>
    %421 = arith.mulf %417, %376 : vector<8x32xf32>
    %422 = arith.mulf %416, %420 : vector<8x32xf32>
    %423 = arith.addf %421, %422 : vector<8x32xf32>
    %424 = math.tanh %423 : vector<8x32xf32>
    %425 = arith.mulf %418, %424 : vector<8x32xf32>
    %426 = vector.extract_strided_slice %409 {offsets = [0, 0], sizes = [8, 96], strides = [1, 1]} : vector<8x128xf32> to vector<8x96xf32>
    %427 = arith.negf %426 : vector<8x96xf32>
    %428 = math.exp %427 : vector<8x96xf32>
    %cst_121 = arith.constant 1.000000e+00 : f32
    %429 = vector.broadcast %cst_121 : f32 to vector<8x96xf32>
    %430 = arith.addf %429, %428 : vector<8x96xf32>
    %431 = arith.divf %429, %430 : vector<8x96xf32>
    %432 = vector.extract_strided_slice %431 {offsets = [0, 0], sizes = [8, 32], strides = [1, 1]} : vector<8x96xf32> to vector<8x32xf32>
    %433 = vector.extract_strided_slice %431 {offsets = [0, 32], sizes = [8, 32], strides = [1, 1]} : vector<8x96xf32> to vector<8x32xf32>
    %434 = vector.extract_strided_slice %431 {offsets = [0, 64], sizes = [8, 32], strides = [1, 1]} : vector<8x96xf32> to vector<8x32xf32>
    %435 = vector.extract_strided_slice %409 {offsets = [0, 96], sizes = [8, 32], strides = [1, 1]} : vector<8x128xf32> to vector<8x32xf32>
    %436 = math.tanh %435 : vector<8x32xf32>
    %437 = arith.mulf %433, %392 : vector<8x32xf32>
    %438 = arith.mulf %432, %436 : vector<8x32xf32>
    %439 = arith.addf %437, %438 : vector<8x32xf32>
    %440 = math.tanh %439 : vector<8x32xf32>
    %441 = arith.mulf %434, %440 : vector<8x32xf32>
    %442 = arith.addf %395, %425 : vector<8x32xf32>
    %443 = arith.addf %396, %441 : vector<8x32xf32>
    %444 = arith.maximumf %397, %425 : vector<8x32xf32>
    %445 = arith.maximumf %398, %441 : vector<8x32xf32>
    %c7_i32_122 = arith.constant 7 : i32
    %cst_123 = arith.constant 1.250000e-01 : f32
    %446 = vector.broadcast %cst_123 : f32 to vector<8x32xf32>
    %447 = arith.mulf %442, %446 : vector<8x32xf32>
    %cst_124 = arith.constant 1.250000e-01 : f32
    %448 = vector.broadcast %cst_124 : f32 to vector<8x32xf32>
    %449 = arith.mulf %443, %448 : vector<8x32xf32>
    %c0_125 = arith.constant 0 : index
    %c0_126 = arith.constant 0 : index
    %450 = vector.load %arg5[%c0_125, %c0_126] : memref<128x64xf32, #tpu.memory_space<vmem>>, vector<32x64xf32>
    %cst_127 = arith.constant dense<0.000000e+00> : vector<8x64xf32>
    %451 = tpu.matmul %447, %450, %cst_127 {dimension_numbers = #tpu.dot_dimension_numbers<[1], [0], [0], [1], [0, 0, 1, 1], [], []>} : vector<8x32xf32>, vector<32x64xf32>, vector<8x64xf32> -> vector<8x64xf32>
    %c32 = arith.constant 32 : index
    %c0_128 = arith.constant 0 : index
    %452 = vector.load %arg5[%c32, %c0_128] : memref<128x64xf32, #tpu.memory_space<vmem>>, vector<32x64xf32>
    %cst_129 = arith.constant dense<0.000000e+00> : vector<8x64xf32>
    %453 = tpu.matmul %449, %452, %cst_129 {dimension_numbers = #tpu.dot_dimension_numbers<[1], [0], [0], [1], [0, 0, 1, 1], [], []>} : vector<8x32xf32>, vector<32x64xf32>, vector<8x64xf32> -> vector<8x64xf32>
    %454 = arith.addf %451, %453 : vector<8x64xf32>
    %c64 = arith.constant 64 : index
    %c0_130 = arith.constant 0 : index
    %455 = vector.load %arg5[%c64, %c0_130] : memref<128x64xf32, #tpu.memory_space<vmem>>, vector<32x64xf32>
    %cst_131 = arith.constant dense<0.000000e+00> : vector<8x64xf32>
    %456 = tpu.matmul %444, %455, %cst_131 {dimension_numbers = #tpu.dot_dimension_numbers<[1], [0], [0], [1], [0, 0, 1, 1], [], []>} : vector<8x32xf32>, vector<32x64xf32>, vector<8x64xf32> -> vector<8x64xf32>
    %457 = arith.addf %454, %456 : vector<8x64xf32>
    %c96 = arith.constant 96 : index
    %c0_132 = arith.constant 0 : index
    %458 = vector.load %arg5[%c96, %c0_132] : memref<128x64xf32, #tpu.memory_space<vmem>>, vector<32x64xf32>
    %cst_133 = arith.constant dense<0.000000e+00> : vector<8x64xf32>
    %459 = tpu.matmul %445, %458, %cst_133 {dimension_numbers = #tpu.dot_dimension_numbers<[1], [0], [0], [1], [0, 0, 1, 1], [], []>} : vector<8x32xf32>, vector<32x64xf32>, vector<8x64xf32> -> vector<8x64xf32>
    %460 = arith.addf %457, %459 : vector<8x64xf32>
    %c0_134 = arith.constant 0 : index
    %c0_135 = arith.constant 0 : index
    %461 = vector.load %arg6[%c0_134, %c0_135] : memref<1x64xf32, #tpu.memory_space<vmem>>, vector<1x64xf32>
    %462 = vector.broadcast %461 : vector<1x64xf32> to vector<8x64xf32>
    %463 = arith.addf %460, %462 : vector<8x64xf32>
    %cst_136 = arith.constant 0.000000e+00 : f32
    %464 = vector.broadcast %cst_136 : f32 to vector<8x64xf32>
    %465 = arith.maximumf %463, %464 : vector<8x64xf32>
    %c0_137 = arith.constant 0 : index
    %c0_138 = arith.constant 0 : index
    %466 = vector.load %arg7[%c0_137, %c0_138] : memref<64x1xf32, #tpu.memory_space<vmem>>, vector<64x1xf32>
    %cst_139 = arith.constant dense<0.000000e+00> : vector<8x1xf32>
    %467 = tpu.matmul %465, %466, %cst_139 {dimension_numbers = #tpu.dot_dimension_numbers<[1], [0], [0], [1], [0, 0, 1, 1], [], []>} : vector<8x64xf32>, vector<64x1xf32>, vector<8x1xf32> -> vector<8x1xf32>
    %c0_140 = arith.constant 0 : index
    %c0_141 = arith.constant 0 : index
    %468 = vector.load %arg8[%c0_140, %c0_141] : memref<1x1xf32, #tpu.memory_space<vmem>>, vector<1x1xf32>
    %469 = vector.broadcast %468 : vector<1x1xf32> to vector<8x1xf32>
    %470 = arith.addf %467, %469 : vector<8x1xf32>
    %c0_142 = arith.constant 0 : index
    %c0_143 = arith.constant 0 : index
    %471 = vector.load %arg9[%c0_142, %c0_143] : memref<8x1xf32, #tpu.memory_space<vmem>>, vector<8x1xf32>
    tpu.vector_store %arg9[%c0_142, %c0_143], %470 {strides = array<i32>} : memref<8x1xf32, #tpu.memory_space<vmem>>, vector<8x1xf32>,
    return
  }
}

</mosaic_0001>

<llo_original>
// kernel: tpu_custom_call.1
$region0: #{tpu_custom_call.1}
  #allocation0 [shape = 'u32[]', space=smem, size = 0x4, offset = 0x4, fixed_abs, tag = 'smem constant byte address 0x4 - core index']
  #allocation1 [shape = 'u32[72,128]{1,0:T(1,128)}', space=vmem, size = 0x9000, scoped, tag = 'internal scratch']
  #allocation2 [shape = 'f32[8,8,128]{2,1,0:T(8,128)}', space=vmem, size = 0x8000, scoped, tag = 'scratch operand']
  #allocation3 [shape = 'f32[8,8,128]{2,1,0:T(8,128)}', space=vmem, size = 0x8000, scoped, tag = 'scratch operand']
  #allocation4 [shape = 'f32[1,1]{1,0:T(1,128)S(1)}', space=vmem, size = 0x200, scoped, tag = 'scoped memory for tpu_custom_call.1']
  %s0 = inlined_call_operand.vmem [shape: f32[64,32], index: 0, kind: input, shape index: {}]
  %s1 = inlined_call_operand.vmem [shape: f32[32,256], index: 1, kind: input, shape index: {}]
  %s2 = inlined_call_operand.vmem [shape: f32[1,256], index: 2, kind: input, shape index: {}]
  %s3 = inlined_call_operand.vmem [shape: f32[32,128], index: 3, kind: input, shape index: {}]
  %s4 = inlined_call_operand.vmem [shape: f32[32,128], index: 4, kind: input, shape index: {}]
  %s5 = inlined_call_operand.vmem [shape: f32[128,64], index: 5, kind: input, shape index: {}]
  %s6 = inlined_call_operand.vmem [shape: f32[1,64], index: 6, kind: input, shape index: {}]
  %s7 = inlined_call_operand.vmem [shape: f32[64,1], index: 7, kind: input, shape index: {}]
  %s8 = inlined_call_operand.<no memory space> [shape: f32[1,1], index: 8, kind: input, shape index: {}]
  %s9 = inlined_call_operand.vmem [shape: f32[8,1], index: 9, kind: output, shape index: {}]
  %s10 = sld [smem:[#allocation0]]
  $region46: #{tpu_custom_call.1} parent=0
    _
  %s12 = ssub.s32 1, %s10
  %s13 = scalar_select 0, %s12, %s10
  %v14 = vstv %s8
  %15 = vst [vmem:[#allocation4] sm:$0x1] %v14
  // Predicated region
  $region2: #{tpu_custom_call.1} parent=0 // pred_check
    _
  $region3: #{tpu_custom_call.1} parent=0 // pred_check_branch
    %17 = sbr.rel (0) target = $region5
  $region4: #{tpu_custom_call.1} parent=0 // pred_region
    _
  $region5: #{tpu_custom_call.1} parent=0 // pred_fallthru
    _
  // Predicated region
  $region6: #{tpu_custom_call.1} parent=0 // pred_check
    _
  $region7: #{tpu_custom_call.1} parent=0 // pred_check_branch
    %19 = sbr.rel (0) target = $region9
  $region8: #{tpu_custom_call.1} parent=0 // pred_region
    _
  $region9: #{tpu_custom_call.1} parent=0 // pred_fallthru
    _
  // Predicated region
  $region10: #{tpu_custom_call.1} parent=0 // pred_check
    _
  $region11: #{tpu_custom_call.1} parent=0 // pred_check_branch
    %21 = sbr.rel (0) target = $region13
  $region12: #{tpu_custom_call.1} parent=0 // pred_region
    _
  $region13: #{tpu_custom_call.1} parent=0 // pred_fallthru
    _
  // Predicated region
  $region14: #{tpu_custom_call.1} parent=0 // pred_check
    _
  $region15: #{tpu_custom_call.1} parent=0 // pred_check_branch
    %23 = sbr.rel (0) target = $region17
  $region16: #{tpu_custom_call.1} parent=0 // pred_region
    _
  $region17: #{tpu_custom_call.1} parent=0 // pred_fallthru
    _
  // Predicated region
  $region18: #{tpu_custom_call.1} parent=0 // pred_check
    _
  $region19: #{tpu_custom_call.1} parent=0 // pred_check_branch
    %25 = sbr.rel (0) target = $region21
  $region20: #{tpu_custom_call.1} parent=0 // pred_region
    _
  $region21: #{tpu_custom_call.1} parent=0 // pred_fallthru
    _
  // Predicated region
  $region22: #{tpu_custom_call.1} parent=0 // pred_check
    _
  $region23: #{tpu_custom_call.1} parent=0 // pred_check_branch
    %27 = sbr.rel (0) target = $region25
  $region24: #{tpu_custom_call.1} parent=0 // pred_region
    _
  $region25: #{tpu_custom_call.1} parent=0 // pred_fallthru
    _
  // Predicated region
  $region26: #{tpu_custom_call.1} parent=0 // pred_check
    _
  $region27: #{tpu_custom_call.1} parent=0 // pred_check_branch
    %29 = sbr.rel (0) target = $region29
  $region28: #{tpu_custom_call.1} parent=0 // pred_region
    _
  $region29: #{tpu_custom_call.1} parent=0 // pred_fallthru
    _
  // Predicated region
  $region30: #{tpu_custom_call.1} parent=0 // pred_check
    _
  $region31: #{tpu_custom_call.1} parent=0 // pred_check_branch
    %31 = sbr.rel (0) target = $region33
  $region32: #{tpu_custom_call.1} parent=0 // pred_region
    _
  $region33: #{tpu_custom_call.1} parent=0 // pred_fallthru
    _
  // Predicated region
  $region34: #{tpu_custom_call.1} parent=0 // pred_check
    _
  $region35: #{tpu_custom_call.1} parent=0 // pred_check_branch
    %33 = sbr.rel (0) target = $region37
  $region36: #{tpu_custom_call.1} parent=0 // pred_region
    _
  $region37: #{tpu_custom_call.1} parent=0 // pred_fallthru
    _
  %v34 = vld [vmem:[%s0] sm:$0xff]
  %v35 = vld [vmem:[%s0 + $0x8] sm:$0xff]
  %v36 = vld [vmem:[%s0 + $0x10] sm:$0xff]
  %v37 = vld [vmem:[%s0 + $0x18] sm:$0xff]
  %v38 = vld [vmem:[%s0 + $0x20] sm:$0xff]
  %v39 = vld [vmem:[%s0 + $0x28] sm:$0xff]
  %v40 = vld [vmem:[%s0 + $0x30] sm:$0xff]
  %v41 = vld [vmem:[%s0 + $0x38] sm:$0xff]
  %v42 = vld [vmem:[%s1] sm:$0xff]
  %v43 = vld [vmem:[%s1 + $0x8] sm:$0xff]
  %v44 = vld [vmem:[%s1 + $0x10] sm:$0xff]
  %v45 = vld [vmem:[%s1 + $0x18] sm:$0xff]
  %v46 = vld [vmem:[%s1 + $0x20] sm:$0xff]
  %v47 = vld [vmem:[%s1 + $0x28] sm:$0xff]
  %v48 = vld [vmem:[%s1 + $0x30] sm:$0xff]
  %v49 = vld [vmem:[%s1 + $0x38] sm:$0xff]
  %v50 = vld [vmem:[%s2] sm:$0x3]
  %v52 = vperm.slane %v50, 0
  %v53 = vperm.slane %v50, 1
  %vm56 = vcmask 261120
  %v58 = vsel %vm56, %v34, 0
  %v61 = vsel %vm56, %v35, 0
  %v64 = vsel %vm56, %v36, 0
  %v67 = vsel %vm56, %v37, 0
  %v70 = vsel %vm56, %v38, 0
  %v73 = vsel %vm56, %v39, 0
  %v76 = vsel %vm56, %v40, 0
  %v79 = vsel %vm56, %v41, 0
  %81 = vmatpush.msra.mxu0 0.0
  %82 = vmatpush.msra.mxu0 0.0
  %83 = vmatpush.msra.mxu0 0.0
  %84 = vmatpush.msra.mxu0 0.0
  %85 = vmatpush.msra.mxu0 0.0
  %86 = vmatpush.msra.mxu0 0.0
  %87 = vmatpush.msra.mxu0 0.0
  %88 = vmatpush.msra.mxu0 0.0
  %89 = vmatpush.msra.mxu0 0.0
  %90 = vmatpush.msra.mxu0 0.0
  %91 = vmatpush.msra.mxu0 0.0
  %92 = vmatpush.msra.mxu0 0.0
  %93 = vmatpush.msra.mxu0 %v48
  %94 = vmatpush.msra.mxu0 %v46
  %95 = vmatpush.msra.mxu0 %v44
  %96 = vmatpush.msra.mxu0 %v42
  %97 = vmatmul.f32.gmra.mxu0 %v58
  %v98 = vpop.f32.mrf.mxu0
  %v99 = vadd.f32 %v52, %v98
  %100 = vmatmul.f32.gmra.mxu0 %v61
  %v101 = vpop.f32.mrf.mxu0
  %v102 = vadd.f32 %v52, %v101
  %103 = vmatmul.f32.gmra.mxu0 %v64
  %v104 = vpop.f32.mrf.mxu0
  %v105 = vadd.f32 %v52, %v104
  %106 = vmatmul.f32.gmra.mxu0 %v67
  %v107 = vpop.f32.mrf.mxu0
  %v108 = vadd.f32 %v52, %v107
  %109 = vmatmul.f32.gmra.mxu0 %v70
  %v110 = vpop.f32.mrf.mxu0
  %v111 = vadd.f32 %v52, %v110
  %112 = vmatmul.f32.gmra.mxu0 %v73
  %v113 = vpop.f32.mrf.mxu0
  %v114 = vadd.f32 %v52, %v113
  %115 = vmatmul.f32.gmra.mxu0 %v76
  %v116 = vpop.f32.mrf.mxu0
  %v117 = vadd.f32 %v52, %v116
  %118 = vmatmul.f32.gmra.mxu0 %v79
  %v119 = vpop.f32.mrf.mxu0
  %v120 = vadd.f32 %v52, %v119
  %121 = vdwg.mxu0
  %122 = vmatpush.msra.mxu0 0.0
  %123 = vmatpush.msra.mxu0 0.0
  %124 = vmatpush.msra.mxu0 0.0
  %125 = vmatpush.msra.mxu0 0.0
  %126 = vmatpush.msra.mxu0 0.0
  %127 = vmatpush.msra.mxu0 0.0
  %128 = vmatpush.msra.mxu0 0.0
  %129 = vmatpush.msra.mxu0 0.0
  %130 = vmatpush.msra.mxu0 0.0
  %131 = vmatpush.msra.mxu0 0.0
  %132 = vmatpush.msra.mxu0 0.0
  %133 = vmatpush.msra.mxu0 0.0
  %134 = vmatpush.msra.mxu0 %v49
  %135 = vmatpush.msra.mxu0 %v47
  %136 = vmatpush.msra.mxu0 %v45
  %137 = vmatpush.msra.mxu0 %v43
  %138 = vmatmul.f32.gmra.mxu0 %v58
  %v139 = vpop.f32.mrf.mxu0
  %v140 = vadd.f32 %v53, %v139
  %141 = vmatmul.f32.gmra.mxu0 %v61
  %v142 = vpop.f32.mrf.mxu0
  %v143 = vadd.f32 %v53, %v142
  %144 = vmatmul.f32.gmra.mxu0 %v64
  %v145 = vpop.f32.mrf.mxu0
  %v146 = vadd.f32 %v53, %v145
  %147 = vmatmul.f32.gmra.mxu0 %v67
  %v148 = vpop.f32.mrf.mxu0
  %v149 = vadd.f32 %v53, %v148
  %150 = vmatmul.f32.gmra.mxu0 %v70
  %v151 = vpop.f32.mrf.mxu0
  %v152 = vadd.f32 %v53, %v151
  %153 = vmatmul.f32.gmra.mxu0 %v73
  %v154 = vpop.f32.mrf.mxu0
  %v155 = vadd.f32 %v53, %v154
  %156 = vmatmul.f32.gmra.mxu0 %v76
  %v157 = vpop.f32.mrf.mxu0
  %v158 = vadd.f32 %v53, %v157
  %159 = vmatmul.f32.gmra.mxu0 %v79
  %v160 = vpop.f32.mrf.mxu0
  %v161 = vadd.f32 %v53, %v160
  %162 = vdwg.mxu0
  %163 = vst [vmem:[#allocation2] sm:$0xff] %v99
  %164 = vst [vmem:[#allocation3] sm:$0xff] %v140
  %s165 = scalar_lea.vmem [#allocation2], 8
  %166 = vst [vmem:[%s165] sm:$0xff] %v102
  %s167 = scalar_lea.vmem [#allocation3], 8
  %168 = vst [vmem:[%s167] sm:$0xff] %v143
  %s169 = scalar_lea.vmem [#allocation2], 16
  %170 = vst [vmem:[%s169] sm:$0xff] %v105
  %s171 = scalar_lea.vmem [#allocation3], 16
  %172 = vst [vmem:[%s171] sm:$0xff] %v146
  %s173 = scalar_lea.vmem [#allocation2], 24
  %174 = vst [vmem:[%s173] sm:$0xff] %v108
  %s175 = scalar_lea.vmem [#allocation3], 24
  %176 = vst [vmem:[%s175] sm:$0xff] %v149
  %s177 = scalar_lea.vmem [#allocation2], 32
  %178 = vst [vmem:[%s177] sm:$0xff] %v111
  %s179 = scalar_lea.vmem [#allocation3], 32
  %180 = vst [vmem:[%s179] sm:$0xff] %v152
  %s181 = scalar_lea.vmem [#allocation2], 40
  %182 = vst [vmem:[%s181] sm:$0xff] %v114
  %s183 = scalar_lea.vmem [#allocation3], 40
  %184 = vst [vmem:[%s183] sm:$0xff] %v155
  %s185 = scalar_lea.vmem [#allocation2], 48
  %186 = vst [vmem:[%s185] sm:$0xff] %v117
  %s187 = scalar_lea.vmem [#allocation3], 48
  %188 = vst [vmem:[%s187] sm:$0xff] %v158
  %s189 = scalar_lea.vmem [#allocation2], 56
  %190 = vst [vmem:[%s189] sm:$0xff] %v120
  %s191 = scalar_lea.vmem [#allocation3], 56
  %192 = vst [vmem:[%s191] sm:$0xff] %v161
  %v193 = vld [vmem:[%s3] sm:$0xff]
  %v194 = vld [vmem:[%s3 + $0x8] sm:$0xff]
  %v195 = vld [vmem:[%s3 + $0x10] sm:$0xff]
  %v196 = vld [vmem:[%s3 + $0x18] sm:$0xff]
  %v197 = vld [vmem:[%s4] sm:$0xff]
  %v198 = vld [vmem:[%s4 + $0x8] sm:$0xff]
  %v199 = vld [vmem:[%s4 + $0x10] sm:$0xff]
  %v200 = vld [vmem:[%s4 + $0x18] sm:$0xff]
  %v201 = vld [vmem:[#allocation2] sm:$0xff]
  %v202 = vxor.u32 %v201, 2147483648
  %v203 = vmul.f32 %v202, 1.442695
  %v204 = vpow.pop %v203
  %v205 = vadd.f32 %v204, 1.0
  %v206 = vrcp.pop %v205
  %v207 = vmul.f32 %v205, %v206
  %v208 = vsub.f32 1.0, %v207
  %v209 = vmul.f32 %v206, %v208
  %v210 = vadd.f32 %v206, %v209
  %vm211 = vweird.f32 %v205
  %vm212 = vweird.f32 %v206
  %vm213 = vmor %vm211, %vm212
  %v214 = vsel %vm213, %v206, %v210
  %v215 = vand.u32 2147483647, %v205
  %vm216 = vcmp.eq.f32.partialorder %v215, 8.507059e+37
  %v217 = vand.u32 %v205, 2147483648
  %v218 = vor.u32 1.1754944e-38, %v217
  %v219 = vsel %vm216, %v218, %v214
  %v220 = vmul.f32 1.0, %v219
  %v221 = vtanh.pop %v201
  %v222 = vmul.f32 %v220, 0.0
  %224 = vrot.lane.b32.xlu0 %v221, 32
  %v225 = vpop.permute.xlu0 %224
  %v227 = vmul.f32 %v220, %v225
  %229 = vrot.lane.b32.xlu0 %v227, 32
  %v230 = vpop.permute.xlu0 %229
  %v232 = vadd.f32 %v222, %v230
  %v233 = vtanh.pop %v232
  %235 = vrot.lane.b32.xlu0 %v233, 32
  %v236 = vpop.permute.xlu0 %235
  %v238 = vmul.f32 %v220, %v236
  %v239 = vld [vmem:[%s191] sm:$0xff]
  %v240 = vxor.u32 %v239, 2147483648
  %v241 = vmul.f32 %v240, 1.442695
  %v242 = vpow.pop %v241
  %v243 = vadd.f32 %v242, 1.0
  %v244 = vrcp.pop %v243
  %v245 = vmul.f32 %v243, %v244
  %v246 = vsub.f32 1.0, %v245
  %v247 = vmul.f32 %v244, %v246
  %v248 = vadd.f32 %v244, %v247
  %vm249 = vweird.f32 %v243
  %vm250 = vweird.f32 %v244
  %vm251 = vmor %vm249, %vm250
  %v252 = vsel %vm251, %v244, %v248
  %v253 = vand.u32 2147483647, %v243
  %vm254 = vcmp.eq.f32.partialorder %v253, 8.507059e+37
  %v255 = vand.u32 %v243, 2147483648
  %v256 = vor.u32 1.1754944e-38, %v255
  %v257 = vsel %vm254, %v256, %v252
  %v258 = vmul.f32 1.0, %v257
  %v259 = vtanh.pop %v239
  %v260 = vmul.f32 %v258, 0.0
  %262 = vrot.lane.b32.xlu0 %v259, 32
  %v263 = vpop.permute.xlu0 %262
  %v265 = vmul.f32 %v258, %v263
  %267 = vrot.lane.b32.xlu0 %v265, 32
  %v268 = vpop.permute.xlu0 %267
  %v270 = vadd.f32 %v260, %v268
  %v271 = vtanh.pop %v270
  %273 = vrot.lane.b32.xlu0 %v271, 32
  %v274 = vpop.permute.xlu0 %273
  %v276 = vmul.f32 %v258, %v274
  %v277 = vld [vmem:[%s165] sm:$0xff]
  %279 = vrot.lane.b32.xlu0 %v238, 64
  %v280 = vpop.permute.xlu0 %279
  %v281 = vsel %vm56, %v280, 0
  %283 = vmatpush.msra.mxu0 0.0
  %284 = vmatpush.msra.mxu0 0.0
  %285 = vmatpush.msra.mxu0 0.0
  %286 = vmatpush.msra.mxu0 0.0
  %287 = vmatpush.msra.mxu0 0.0
  %288 = vmatpush.msra.mxu0 0.0
  %289 = vmatpush.msra.mxu0 0.0
  %290 = vmatpush.msra.mxu0 0.0
  %291 = vmatpush.msra.mxu0 0.0
  %292 = vmatpush.msra.mxu0 0.0
  %293 = vmatpush.msra.mxu0 0.0
  %294 = vmatpush.msra.mxu0 0.0
  %295 = vmatpush.msra.mxu0 %v196
  %296 = vmatpush.msra.mxu0 %v195
  %297 = vmatpush.msra.mxu0 %v194
  %298 = vmatpush.msra.mxu0 %v193
  %299 = vmatmul.f32.gmra.mxu0 %v281
  %v300 = vpop.f32.mrf.mxu0
  %v301 = vadd.f32 0.0, %v300
  %302 = vdwg.mxu0
  %v303 = vadd.f32 %v277, %v301
  %v304 = vld [vmem:[%s187] sm:$0xff]
  %306 = vrot.lane.b32.xlu0 %v276, 64
  %v307 = vpop.permute.xlu0 %306
  %v308 = vsel %vm56, %v307, 0
  %310 = vmatpush.msra.mxu0 0.0
  %311 = vmatpush.msra.mxu0 0.0
  %312 = vmatpush.msra.mxu0 0.0
  %313 = vmatpush.msra.mxu0 0.0
  %314 = vmatpush.msra.mxu0 0.0
  %315 = vmatpush.msra.mxu0 0.0
  %316 = vmatpush.msra.mxu0 0.0
  %317 = vmatpush.msra.mxu0 0.0
  %318 = vmatpush.msra.mxu0 0.0
  %319 = vmatpush.msra.mxu0 0.0
  %320 = vmatpush.msra.mxu0 0.0
  %321 = vmatpush.msra.mxu0 0.0
  %322 = vmatpush.msra.mxu0 %v200
  %323 = vmatpush.msra.mxu0 %v199
  %324 = vmatpush.msra.mxu0 %v198
  %325 = vmatpush.msra.mxu0 %v197
  %326 = vmatmul.f32.gmra.mxu0 %v308
  %v327 = vpop.f32.mrf.mxu0
  %v328 = vadd.f32 0.0, %v327
  %329 = vdwg.mxu0
  %v330 = vadd.f32 %v304, %v328
  %v331 = vxor.u32 %v303, 2147483648
  %v332 = vmul.f32 %v331, 1.442695
  %v333 = vpow.pop %v332
  %v334 = vadd.f32 %v333, 1.0
  %v335 = vrcp.pop %v334
  %v336 = vmul.f32 %v334, %v335
  %v337 = vsub.f32 1.0, %v336
  %v338 = vmul.f32 %v335, %v337
  %v339 = vadd.f32 %v335, %v338
  %vm340 = vweird.f32 %v334
  %vm341 = vweird.f32 %v335
  %vm342 = vmor %vm340, %vm341
  %v343 = vsel %vm342, %v335, %v339
  %v344 = vand.u32 2147483647, %v334
  %vm345 = vcmp.eq.f32.partialorder %v344, 8.507059e+37
  %v346 = vand.u32 %v334, 2147483648
  %v347 = vor.u32 1.1754944e-38, %v346
  %v348 = vsel %vm345, %v347, %v343
  %v349 = vmul.f32 1.0, %v348
  %v350 = vtanh.pop %v303
  %v351 = vmul.f32 %v349, %v232
  %353 = vrot.lane.b32.xlu0 %v350, 32
  %v354 = vpop.permute.xlu0 %353
  %v356 = vmul.f32 %v349, %v354
  %358 = vrot.lane.b32.xlu0 %v356, 32
  %v359 = vpop.permute.xlu0 %358
  %v361 = vadd.f32 %v351, %v359
  %v362 = vtanh.pop %v361
  %364 = vrot.lane.b32.xlu0 %v362, 32
  %v365 = vpop.permute.xlu0 %364
  %v367 = vmul.f32 %v349, %v365
  %v368 = vxor.u32 %v330, 2147483648
  %v369 = vmul.f32 %v368, 1.442695
  %v370 = vpow.pop %v369
  %v371 = vadd.f32 %v370, 1.0
  %v372 = vrcp.pop %v371
  %v373 = vmul.f32 %v371, %v372
  %v374 = vsub.f32 1.0, %v373
  %v375 = vmul.f32 %v372, %v374
  %v376 = vadd.f32 %v372, %v375
  %vm377 = vweird.f32 %v371
  %vm378 = vweird.f32 %v372
  %vm379 = vmor %vm377, %vm378
  %v380 = vsel %vm379, %v372, %v376
  %v381 = vand.u32 2147483647, %v371
  %vm382 = vcmp.eq.f32.partialorder %v381, 8.507059e+37
  %v383 = vand.u32 %v371, 2147483648
  %v384 = vor.u32 1.1754944e-38, %v383
  %v385 = vsel %vm382, %v384, %v380
  %v386 = vmul.f32 1.0, %v385
  %v387 = vtanh.pop %v330
  %v388 = vmul.f32 %v386, %v270
  %390 = vrot.lane.b32.xlu0 %v387, 32
  %v391 = vpop.permute.xlu0 %390
  %v393 = vmul.f32 %v386, %v391
  %395 = vrot.lane.b32.xlu0 %v393, 32
  %v396 = vpop.permute.xlu0 %395
  %v398 = vadd.f32 %v388, %v396
  %v399 = vtanh.pop %v398
  %401 = vrot.lane.b32.xlu0 %v399, 32
  %v402 = vpop.permute.xlu0 %401
  %v404 = vmul.f32 %v386, %v402
  %v405 = vadd.f32 %v238, %v367
  %v406 = vadd.f32 %v276, %v404
  %v407 = vmax.f32 %v238, %v367
  %v408 = vmax.f32 %v276, %v404
  %v409 = vld [vmem:[%s169] sm:$0xff]
  %411 = vrot.lane.b32.xlu0 %v367, 64
  %v412 = vpop.permute.xlu0 %411
  %v413 = vsel %vm56, %v412, 0
  %415 = vmatpush.msra.mxu0 0.0
  %416 = vmatpush.msra.mxu0 0.0
  %417 = vmatpush.msra.mxu0 0.0
  %418 = vmatpush.msra.mxu0 0.0
  %419 = vmatpush.msra.mxu0 0.0
  %420 = vmatpush.msra.mxu0 0.0
  %421 = vmatpush.msra.mxu0 0.0
  %422 = vmatpush.msra.mxu0 0.0
  %423 = vmatpush.msra.mxu0 0.0
  %424 = vmatpush.msra.mxu0 0.0
  %425 = vmatpush.msra.mxu0 0.0
  %426 = vmatpush.msra.mxu0 0.0
  %427 = vmatpush.msra.mxu0 %v196
  %428 = vmatpush.msra.mxu0 %v195
  %429 = vmatpush.msra.mxu0 %v194
  %430 = vmatpush.msra.mxu0 %v193
  %431 = vmatmul.f32.gmra.mxu0 %v413
  %v432 = vpop.f32.mrf.mxu0
  %v433 = vadd.f32 0.0, %v432
  %434 = vdwg.mxu0
  %v435 = vadd.f32 %v409, %v433
  %v436 = vld [vmem:[%s183] sm:$0xff]
  %438 = vrot.lane.b32.xlu0 %v404, 64
  %v439 = vpop.permute.xlu0 %438
  %v440 = vsel %vm56, %v439, 0
  %442 = vmatpush.msra.mxu0 0.0
  %443 = vmatpush.msra.mxu0 0.0
  %444 = vmatpush.msra.mxu0 0.0
  %445 = vmatpush.msra.mxu0 0.0
  %446 = vmatpush.msra.mxu0 0.0
  %447 = vmatpush.msra.mxu0 0.0
  %448 = vmatpush.msra.mxu0 0.0
  %449 = vmatpush.msra.mxu0 0.0
  %450 = vmatpush.msra.mxu0 0.0
  %451 = vmatpush.msra.mxu0 0.0
  %452 = vmatpush.msra.mxu0 0.0
  %453 = vmatpush.msra.mxu0 0.0
  %454 = vmatpush.msra.mxu0 %v200
  %455 = vmatpush.msra.mxu0 %v199
  %456 = vmatpush.msra.mxu0 %v198
  %457 = vmatpush.msra.mxu0 %v197
  %458 = vmatmul.f32.gmra.mxu0 %v440
  %v459 = vpop.f32.mrf.mxu0
  %v460 = vadd.f32 0.0, %v459
  %461 = vdwg.mxu0
  %v462 = vadd.f32 %v436, %v460
  %v463 = vxor.u32 %v435, 2147483648
  %v464 = vmul.f32 %v463, 1.442695
  %v465 = vpow.pop %v464
  %v466 = vadd.f32 %v465, 1.0
  %v467 = vrcp.pop %v466
  %v468 = vmul.f32 %v466, %v467
  %v469 = vsub.f32 1.0, %v468
  %v470 = vmul.f32 %v467, %v469
  %v471 = vadd.f32 %v467, %v470
  %vm472 = vweird.f32 %v466
  %vm473 = vweird.f32 %v467
  %vm474 = vmor %vm472, %vm473
  %v475 = vsel %vm474, %v467, %v471
  %v476 = vand.u32 2147483647, %v466
  %vm477 = vcmp.eq.f32.partialorder %v476, 8.507059e+37
  %v478 = vand.u32 %v466, 2147483648
  %v479 = vor.u32 1.1754944e-38, %v478
  %v480 = vsel %vm477, %v479, %v475
  %v481 = vmul.f32 1.0, %v480
  %v482 = vtanh.pop %v435
  %v483 = vmul.f32 %v481, %v361
  %485 = vrot.lane.b32.xlu0 %v482, 32
  %v486 = vpop.permute.xlu0 %485
  %v488 = vmul.f32 %v481, %v486
  %490 = vrot.lane.b32.xlu0 %v488, 32
  %v491 = vpop.permute.xlu0 %490
  %v493 = vadd.f32 %v483, %v491
  %v494 = vtanh.pop %v493
  %496 = vrot.lane.b32.xlu0 %v494, 32
  %v497 = vpop.permute.xlu0 %496
  %v499 = vmul.f32 %v481, %v497
  %v500 = vxor.u32 %v462, 2147483648
  %v501 = vmul.f32 %v500, 1.442695
  %v502 = vpow.pop %v501
  %v503 = vadd.f32 %v502, 1.0
  %v504 = vrcp.pop %v503
  %v505 = vmul.f32 %v503, %v504
  %v506 = vsub.f32 1.0, %v505
  %v507 = vmul.f32 %v504, %v506
  %v508 = vadd.f32 %v504, %v507
  %vm509 = vweird.f32 %v503
  %vm510 = vweird.f32 %v504
  %vm511 = vmor %vm509, %vm510
  %v512 = vsel %vm511, %v504, %v508
  %v513 = vand.u32 2147483647, %v503
  %vm514 = vcmp.eq.f32.partialorder %v513, 8.507059e+37
  %v515 = vand.u32 %v503, 2147483648
  %v516 = vor.u32 1.1754944e-38, %v515
  %v517 = vsel %vm514, %v516, %v512
  %v518 = vmul.f32 1.0, %v517
  %v519 = vtanh.pop %v462
  %v520 = vmul.f32 %v518, %v398
  %522 = vrot.lane.b32.xlu0 %v519, 32
  %v523 = vpop.permute.xlu0 %522
  %v525 = vmul.f32 %v518, %v523
  %527 = vrot.lane.b32.xlu0 %v525, 32
  %v528 = vpop.permute.xlu0 %527
  %v530 = vadd.f32 %v520, %v528
  %v531 = vtanh.pop %v530
  %533 = vrot.lane.b32.xlu0 %v531, 32
  %v534 = vpop.permute.xlu0 %533
  %v536 = vmul.f32 %v518, %v534
  %v537 = vadd.f32 %v405, %v499
  %v538 = vadd.f32 %v406, %v536
  %v539 = vmax.f32 %v407, %v499
  %v540 = vmax.f32 %v408, %v536
  %v541 = vld [vmem:[%s173] sm:$0xff]
  %543 = vrot.lane.b32.xlu0 %v499, 64
  %v544 = vpop.permute.xlu0 %543
  %v545 = vsel %vm56, %v544, 0
  %547 = vmatpush.msra.mxu0 0.0
  %548 = vmatpush.msra.mxu0 0.0
  %549 = vmatpush.msra.mxu0 0.0
  %550 = vmatpush.msra.mxu0 0.0
  %551 = vmatpush.msra.mxu0 0.0
  %552 = vmatpush.msra.mxu0 0.0
  %553 = vmatpush.msra.mxu0 0.0
  %554 = vmatpush.msra.mxu0 0.0
  %555 = vmatpush.msra.mxu0 0.0
  %556 = vmatpush.msra.mxu0 0.0
  %557 = vmatpush.msra.mxu0 0.0
  %558 = vmatpush.msra.mxu0 0.0
  %559 = vmatpush.msra.mxu0 %v196
  %560 = vmatpush.msra.mxu0 %v195
  %561 = vmatpush.msra.mxu0 %v194
  %562 = vmatpush.msra.mxu0 %v193
  %563 = vmatmul.f32.gmra.mxu0 %v545
  %v564 = vpop.f32.mrf.mxu0
  %v565 = vadd.f32 0.0, %v564
  %566 = vdwg.mxu0
  %v567 = vadd.f32 %v541, %v565
  %v568 = vld [vmem:[%s179] sm:$0xff]
  %570 = vrot.lane.b32.xlu0 %v536, 64
  %v571 = vpop.permute.xlu0 %570
  %v572 = vsel %vm56, %v571, 0
  %574 = vmatpush.msra.mxu0 0.0
  %575 = vmatpush.msra.mxu0 0.0
  %576 = vmatpush.msra.mxu0 0.0
  %577 = vmatpush.msra.mxu0 0.0
  %578 = vmatpush.msra.mxu0 0.0
  %579 = vmatpush.msra.mxu0 0.0
  %580 = vmatpush.msra.mxu0 0.0
  %581 = vmatpush.msra.mxu0 0.0
  %582 = vmatpush.msra.mxu0 0.0
  %583 = vmatpush.msra.mxu0 0.0
  %584 = vmatpush.msra.mxu0 0.0
  %585 = vmatpush.msra.mxu0 0.0
  %586 = vmatpush.msra.mxu0 %v200
  %587 = vmatpush.msra.mxu0 %v199
  %588 = vmatpush.msra.mxu0 %v198
  %589 = vmatpush.msra.mxu0 %v197
  %590 = vmatmul.f32.gmra.mxu0 %v572
  %v591 = vpop.f32.mrf.mxu0
  %v592 = vadd.f32 0.0, %v591
  %593 = vdwg.mxu0
  %v594 = vadd.f32 %v568, %v592
  %v595 = vxor.u32 %v567, 2147483648
  %v596 = vmul.f32 %v595, 1.442695
  %v597 = vpow.pop %v596
  %v598 = vadd.f32 %v597, 1.0
  %v599 = vrcp.pop %v598
  %v600 = vmul.f32 %v598, %v599
  %v601 = vsub.f32 1.0, %v600
  %v602 = vmul.f32 %v599, %v601
  %v603 = vadd.f32 %v599, %v602
  %vm604 = vweird.f32 %v598
  %vm605 = vweird.f32 %v599
  %vm606 = vmor %vm604, %vm605
  %v607 = vsel %vm606, %v599, %v603
  %v608 = vand.u32 2147483647, %v598
  %vm609 = vcmp.eq.f32.partialorder %v608, 8.507059e+37
  %v610 = vand.u32 %v598, 2147483648
  %v611 = vor.u32 1.1754944e-38, %v610
  %v612 = vsel %vm609, %v611, %v607
  %v613 = vmul.f32 1.0, %v612
  %v614 = vtanh.pop %v567
  %v615 = vmul.f32 %v613, %v493
  %617 = vrot.lane.b32.xlu0 %v614, 32
  %v618 = vpop.permute.xlu0 %617
  %v620 = vmul.f32 %v613, %v618
  %622 = vrot.lane.b32.xlu0 %v620, 32
  %v623 = vpop.permute.xlu0 %622
  %v625 = vadd.f32 %v615, %v623
  %v626 = vtanh.pop %v625
  %628 = vrot.lane.b32.xlu0 %v626, 32
  %v629 = vpop.permute.xlu0 %628
  %v631 = vmul.f32 %v613, %v629
  %v632 = vxor.u32 %v594, 2147483648
  %v633 = vmul.f32 %v632, 1.442695
  %v634 = vpow.pop %v633
  %v635 = vadd.f32 %v634, 1.0
  %v636 = vrcp.pop %v635
  %v637 = vmul.f32 %v635, %v636
  %v638 = vsub.f32 1.0, %v637
  %v639 = vmul.f32 %v636, %v638
  %v640 = vadd.f32 %v636, %v639
  %vm641 = vweird.f32 %v635
  %vm642 = vweird.f32 %v636
  %vm643 = vmor %vm641, %vm642
  %v644 = vsel %vm643, %v636, %v640
  %v645 = vand.u32 2147483647, %v635
  %vm646 = vcmp.eq.f32.partialorder %v645, 8.507059e+37
  %v647 = vand.u32 %v635, 2147483648
  %v648 = vor.u32 1.1754944e-38, %v647
  %v649 = vsel %vm646, %v648, %v644
  %v650 = vmul.f32 1.0, %v649
  %v651 = vtanh.pop %v594
  %v652 = vmul.f32 %v650, %v530
  %654 = vrot.lane.b32.xlu0 %v651, 32
  %v655 = vpop.permute.xlu0 %654
  %v657 = vmul.f32 %v650, %v655
  %659 = vrot.lane.b32.xlu0 %v657, 32
  %v660 = vpop.permute.xlu0 %659
  %v662 = vadd.f32 %v652, %v660
  %v663 = vtanh.pop %v662
  %665 = vrot.lane.b32.xlu0 %v663, 32
  %v666 = vpop.permute.xlu0 %665
  %v668 = vmul.f32 %v650, %v666
  %v669 = vadd.f32 %v537, %v631
  %v670 = vadd.f32 %v538, %v668
  %v671 = vmax.f32 %v539, %v631
  %v672 = vmax.f32 %v540, %v668
  %v673 = vld [vmem:[%s177] sm:$0xff]
  %675 = vrot.lane.b32.xlu0 %v631, 64
  %v676 = vpop.permute.xlu0 %675
  %v677 = vsel %vm56, %v676, 0
  %679 = vmatpush.msra.mxu0 0.0
  %680 = vmatpush.msra.mxu0 0.0
  %681 = vmatpush.msra.mxu0 0.0
  %682 = vmatpush.msra.mxu0 0.0
  %683 = vmatpush.msra.mxu0 0.0
  %684 = vmatpush.msra.mxu0 0.0
  %685 = vmatpush.msra.mxu0 0.0
  %686 = vmatpush.msra.mxu0 0.0
  %687 = vmatpush.msra.mxu0 0.0
  %688 = vmatpush.msra.mxu0 0.0
  %689 = vmatpush.msra.mxu0 0.0
  %690 = vmatpush.msra.mxu0 0.0
  %691 = vmatpush.msra.mxu0 %v196
  %692 = vmatpush.msra.mxu0 %v195
  %693 = vmatpush.msra.mxu0 %v194
  %694 = vmatpush.msra.mxu0 %v193
  %695 = vmatmul.f32.gmra.mxu0 %v677
  %v696 = vpop.f32.mrf.mxu0
  %v697 = vadd.f32 0.0, %v696
  %698 = vdwg.mxu0
  %v699 = vadd.f32 %v673, %v697
  %v700 = vld [vmem:[%s175] sm:$0xff]
  %702 = vrot.lane.b32.xlu0 %v668, 64
  %v703 = vpop.permute.xlu0 %702
  %v704 = vsel %vm56, %v703, 0
  %706 = vmatpush.msra.mxu0 0.0
  %707 = vmatpush.msra.mxu0 0.0
  %708 = vmatpush.msra.mxu0 0.0
  %709 = vmatpush.msra.mxu0 0.0
  %710 = vmatpush.msra.mxu0 0.0
  %711 = vmatpush.msra.mxu0 0.0
  %712 = vmatpush.msra.mxu0 0.0
  %713 = vmatpush.msra.mxu0 0.0
  %714 = vmatpush.msra.mxu0 0.0
  %715 = vmatpush.msra.mxu0 0.0
  %716 = vmatpush.msra.mxu0 0.0
  %717 = vmatpush.msra.mxu0 0.0
  %718 = vmatpush.msra.mxu0 %v200
  %719 = vmatpush.msra.mxu0 %v199
  %720 = vmatpush.msra.mxu0 %v198
  %721 = vmatpush.msra.mxu0 %v197
  %722 = vmatmul.f32.gmra.mxu0 %v704
  %v723 = vpop.f32.mrf.mxu0
  %v724 = vadd.f32 0.0, %v723
  %725 = vdwg.mxu0
  %v726 = vadd.f32 %v700, %v724
  %v727 = vxor.u32 %v699, 2147483648
  %v728 = vmul.f32 %v727, 1.442695
  %v729 = vpow.pop %v728
  %v730 = vadd.f32 %v729, 1.0
  %v731 = vrcp.pop %v730
  %v732 = vmul.f32 %v730, %v731
  %v733 = vsub.f32 1.0, %v732
  %v734 = vmul.f32 %v731, %v733
  %v735 = vadd.f32 %v731, %v734
  %vm736 = vweird.f32 %v730
  %vm737 = vweird.f32 %v731
  %vm738 = vmor %vm736, %vm737
  %v739 = vsel %vm738, %v731, %v735
  %v740 = vand.u32 2147483647, %v730
  %vm741 = vcmp.eq.f32.partialorder %v740, 8.507059e+37
  %v742 = vand.u32 %v730, 2147483648
  %v743 = vor.u32 1.1754944e-38, %v742
  %v744 = vsel %vm741, %v743, %v739
  %v745 = vmul.f32 1.0, %v744
  %v746 = vtanh.pop %v699
  %v747 = vmul.f32 %v745, %v625
  %749 = vrot.lane.b32.xlu0 %v746, 32
  %v750 = vpop.permute.xlu0 %749
  %v752 = vmul.f32 %v745, %v750
  %754 = vrot.lane.b32.xlu0 %v752, 32
  %v755 = vpop.permute.xlu0 %754
  %v757 = vadd.f32 %v747, %v755
  %v758 = vtanh.pop %v757
  %760 = vrot.lane.b32.xlu0 %v758, 32
  %v761 = vpop.permute.xlu0 %760
  %v763 = vmul.f32 %v745, %v761
  %v764 = vxor.u32 %v726, 2147483648
  %v765 = vmul.f32 %v764, 1.442695
  %v766 = vpow.pop %v765
  %v767 = vadd.f32 %v766, 1.0
  %v768 = vrcp.pop %v767
  %v769 = vmul.f32 %v767, %v768
  %v770 = vsub.f32 1.0, %v769
  %v771 = vmul.f32 %v768, %v770
  %v772 = vadd.f32 %v768, %v771
  %vm773 = vweird.f32 %v767
  %vm774 = vweird.f32 %v768
  %vm775 = vmor %vm773, %vm774
  %v776 = vsel %vm775, %v768, %v772
  %v777 = vand.u32 2147483647, %v767
  %vm778 = vcmp.eq.f32.partialorder %v777, 8.507059e+37
  %v779 = vand.u32 %v767, 2147483648
  %v780 = vor.u32 1.1754944e-38, %v779
  %v781 = vsel %vm778, %v780, %v776
  %v782 = vmul.f32 1.0, %v781
  %v783 = vtanh.pop %v726
  %v784 = vmul.f32 %v782, %v662
  %786 = vrot.lane.b32.xlu0 %v783, 32
  %v787 = vpop.permute.xlu0 %786
  %v789 = vmul.f32 %v782, %v787
  %791 = vrot.lane.b32.xlu0 %v789, 32
  %v792 = vpop.permute.xlu0 %791
  %v794 = vadd.f32 %v784, %v792
  %v795 = vtanh.pop %v794
  %797 = vrot.lane.b32.xlu0 %v795, 32
  %v798 = vpop.permute.xlu0 %797
  %v800 = vmul.f32 %v782, %v798
  %v801 = vadd.f32 %v669, %v763
  %v802 = vadd.f32 %v670, %v800
  %v803 = vmax.f32 %v671, %v763
  %v804 = vmax.f32 %v672, %v800
  %v805 = vld [vmem:[%s181] sm:$0xff]
  %807 = vrot.lane.b32.xlu0 %v763, 64
  %v808 = vpop.permute.xlu0 %807
  %v809 = vsel %vm56, %v808, 0
  %811 = vmatpush.msra.mxu0 0.0
  %812 = vmatpush.msra.mxu0 0.0
  %813 = vmatpush.msra.mxu0 0.0
  %814 = vmatpush.msra.mxu0 0.0
  %815 = vmatpush.msra.mxu0 0.0
  %816 = vmatpush.msra.mxu0 0.0
  %817 = vmatpush.msra.mxu0 0.0
  %818 = vmatpush.msra.mxu0 0.0
  %819 = vmatpush.msra.mxu0 0.0
  %820 = vmatpush.msra.mxu0 0.0
  %821 = vmatpush.msra.mxu0 0.0
  %822 = vmatpush.msra.mxu0 0.0
  %823 = vmatpush.msra.mxu0 %v196
  %824 = vmatpush.msra.mxu0 %v195
  %825 = vmatpush.msra.mxu0 %v194
  %826 = vmatpush.msra.mxu0 %v193
  %827 = vmatmul.f32.gmra.mxu0 %v809
  %v828 = vpop.f32.mrf.mxu0
  %v829 = vadd.f32 0.0, %v828
  %830 = vdwg.mxu0
  %v831 = vadd.f32 %v805, %v829
  %v832 = vld [vmem:[%s171] sm:$0xff]
  %834 = vrot.lane.b32.xlu0 %v800, 64
  %v835 = vpop.permute.xlu0 %834
  %v836 = vsel %vm56, %v835, 0
  %838 = vmatpush.msra.mxu0 0.0
  %839 = vmatpush.msra.mxu0 0.0
  %840 = vmatpush.msra.mxu0 0.0
  %841 = vmatpush.msra.mxu0 0.0
  %842 = vmatpush.msra.mxu0 0.0
  %843 = vmatpush.msra.mxu0 0.0
  %844 = vmatpush.msra.mxu0 0.0
  %845 = vmatpush.msra.mxu0 0.0
  %846 = vmatpush.msra.mxu0 0.0
  %847 = vmatpush.msra.mxu0 0.0
  %848 = vmatpush.msra.mxu0 0.0
  %849 = vmatpush.msra.mxu0 0.0
  %850 = vmatpush.msra.mxu0 %v200
  %851 = vmatpush.msra.mxu0 %v199
  %852 = vmatpush.msra.mxu0 %v198
  %853 = vmatpush.msra.mxu0 %v197
  %854 = vmatmul.f32.gmra.mxu0 %v836
  %v855 = vpop.f32.mrf.mxu0
  %v856 = vadd.f32 0.0, %v855
  %857 = vdwg.mxu0
  %v858 = vadd.f32 %v832, %v856
  %v859 = vxor.u32 %v831, 2147483648
  %v860 = vmul.f32 %v859, 1.442695
  %v861 = vpow.pop %v860
  %v862 = vadd.f32 %v861, 1.0
  %v863 = vrcp.pop %v862
  %v864 = vmul.f32 %v862, %v863
  %v865 = vsub.f32 1.0, %v864
  %v866 = vmul.f32 %v863, %v865
  %v867 = vadd.f32 %v863, %v866
  %vm868 = vweird.f32 %v862
  %vm869 = vweird.f32 %v863
  %vm870 = vmor %vm868, %vm869
  %v871 = vsel %vm870, %v863, %v867
  %v872 = vand.u32 2147483647, %v862
  %vm873 = vcmp.eq.f32.partialorder %v872, 8.507059e+37
  %v874 = vand.u32 %v862, 2147483648
  %v875 = vor.u32 1.1754944e-38, %v874
  %v876 = vsel %vm873, %v875, %v871
  %v877 = vmul.f32 1.0, %v876
  %v878 = vtanh.pop %v831
  %v879 = vmul.f32 %v877, %v757
  %881 = vrot.lane.b32.xlu0 %v878, 32
  %v882 = vpop.permute.xlu0 %881
  %v884 = vmul.f32 %v877, %v882
  %886 = vrot.lane.b32.xlu0 %v884, 32
  %v887 = vpop.permute.xlu0 %886
  %v889 = vadd.f32 %v879, %v887
  %v890 = vtanh.pop %v889
  %892 = vrot.lane.b32.xlu0 %v890, 32
  %v893 = vpop.permute.xlu0 %892
  %v895 = vmul.f32 %v877, %v893
  %v896 = vxor.u32 %v858, 2147483648
  %v897 = vmul.f32 %v896, 1.442695
  %v898 = vpow.pop %v897
  %v899 = vadd.f32 %v898, 1.0
  %v900 = vrcp.pop %v899
  %v901 = vmul.f32 %v899, %v900
  %v902 = vsub.f32 1.0, %v901
  %v903 = vmul.f32 %v900, %v902
  %v904 = vadd.f32 %v900, %v903
  %vm905 = vweird.f32 %v899
  %vm906 = vweird.f32 %v900
  %vm907 = vmor %vm905, %vm906
  %v908 = vsel %vm907, %v900, %v904
  %v909 = vand.u32 2147483647, %v899
  %vm910 = vcmp.eq.f32.partialorder %v909, 8.507059e+37
  %v911 = vand.u32 %v899, 2147483648
  %v912 = vor.u32 1.1754944e-38, %v911
  %v913 = vsel %vm910, %v912, %v908
  %v914 = vmul.f32 1.0, %v913
  %v915 = vtanh.pop %v858
  %v916 = vmul.f32 %v914, %v794
  %918 = vrot.lane.b32.xlu0 %v915, 32
  %v919 = vpop.permute.xlu0 %918
  %v921 = vmul.f32 %v914, %v919
  %923 = vrot.lane.b32.xlu0 %v921, 32
  %v924 = vpop.permute.xlu0 %923
  %v926 = vadd.f32 %v916, %v924
  %v927 = vtanh.pop %v926
  %929 = vrot.lane.b32.xlu0 %v927, 32
  %v930 = vpop.permute.xlu0 %929
  %v932 = vmul.f32 %v914, %v930
  %v933 = vadd.f32 %v801, %v895
  %v934 = vadd.f32 %v802, %v932
  %v935 = vmax.f32 %v803, %v895
  %v936 = vmax.f32 %v804, %v932
  %v937 = vld [vmem:[%s185] sm:$0xff]
  %939 = vrot.lane.b32.xlu0 %v895, 64
  %v940 = vpop.permute.xlu0 %939
  %v941 = vsel %vm56, %v940, 0
  %943 = vmatpush.msra.mxu0 0.0
  %944 = vmatpush.msra.mxu0 0.0
  %945 = vmatpush.msra.mxu0 0.0
  %946 = vmatpush.msra.mxu0 0.0
  %947 = vmatpush.msra.mxu0 0.0
  %948 = vmatpush.msra.mxu0 0.0
  %949 = vmatpush.msra.mxu0 0.0
  %950 = vmatpush.msra.mxu0 0.0
  %951 = vmatpush.msra.mxu0 0.0
  %952 = vmatpush.msra.mxu0 0.0
  %953 = vmatpush.msra.mxu0 0.0
  %954 = vmatpush.msra.mxu0 0.0
  %955 = vmatpush.msra.mxu0 %v196
  %956 = vmatpush.msra.mxu0 %v195
  %957 = vmatpush.msra.mxu0 %v194
  %958 = vmatpush.msra.mxu0 %v193
  %959 = vmatmul.f32.gmra.mxu0 %v941
  %v960 = vpop.f32.mrf.mxu0
  %v961 = vadd.f32 0.0, %v960
  %962 = vdwg.mxu0
  %v963 = vadd.f32 %v937, %v961
  %v964 = vld [vmem:[%s167] sm:$0xff]
  %966 = vrot.lane.b32.xlu0 %v932, 64
  %v967 = vpop.permute.xlu0 %966
  %v968 = vsel %vm56, %v967, 0
  %970 = vmatpush.msra.mxu0 0.0
  %971 = vmatpush.msra.mxu0 0.0
  %972 = vmatpush.msra.mxu0 0.0
  %973 = vmatpush.msra.mxu0 0.0
  %974 = vmatpush.msra.mxu0 0.0
  %975 = vmatpush.msra.mxu0 0.0
  %976 = vmatpush.msra.mxu0 0.0
  %977 = vmatpush.msra.mxu0 0.0
  %978 = vmatpush.msra.mxu0 0.0
  %979 = vmatpush.msra.mxu0 0.0
  %980 = vmatpush.msra.mxu0 0.0
  %981 = vmatpush.msra.mxu0 0.0
  %982 = vmatpush.msra.mxu0 %v200
  %983 = vmatpush.msra.mxu0 %v199
  %984 = vmatpush.msra.mxu0 %v198
  %985 = vmatpush.msra.mxu0 %v197
  %986 = vmatmul.f32.gmra.mxu0 %v968
  %v987 = vpop.f32.mrf.mxu0
  %v988 = vadd.f32 0.0, %v987
  %989 = vdwg.mxu0
  %v990 = vadd.f32 %v964, %v988
  %v991 = vxor.u32 %v963, 2147483648
  %v992 = vmul.f32 %v991, 1.442695
  %v993 = vpow.pop %v992
  %v994 = vadd.f32 %v993, 1.0
  %v995 = vrcp.pop %v994
  %v996 = vmul.f32 %v994, %v995
  %v997 = vsub.f32 1.0, %v996
  %v998 = vmul.f32 %v995, %v997
  %v999 = vadd.f32 %v995, %v998
  %vm1000 = vweird.f32 %v994
  %vm1001 = vweird.f32 %v995
  %vm1002 = vmor %vm1000, %vm1001
  %v1003 = vsel %vm1002, %v995, %v999
  %v1004 = vand.u32 2147483647, %v994
  %vm1005 = vcmp.eq.f32.partialorder %v1004, 8.507059e+37
  %v1006 = vand.u32 %v994, 2147483648
  %v1007 = vor.u32 1.1754944e-38, %v1006
  %v1008 = vsel %vm1005, %v1007, %v1003
  %v1009 = vmul.f32 1.0, %v1008
  %v1010 = vtanh.pop %v963
  %v1011 = vmul.f32 %v1009, %v889
  %1013 = vrot.lane.b32.xlu0 %v1010, 32
  %v1014 = vpop.permute.xlu0 %1013
  %v1016 = vmul.f32 %v1009, %v1014
  %1018 = vrot.lane.b32.xlu0 %v1016, 32
  %v1019 = vpop.permute.xlu0 %1018
  %v1021 = vadd.f32 %v1011, %v1019
  %v1022 = vtanh.pop %v1021
  %1024 = vrot.lane.b32.xlu0 %v1022, 32
  %v1025 = vpop.permute.xlu0 %1024
  %v1027 = vmul.f32 %v1009, %v1025
  %v1028 = vxor.u32 %v990, 2147483648
  %v1029 = vmul.f32 %v1028, 1.442695
  %v1030 = vpow.pop %v1029
  %v1031 = vadd.f32 %v1030, 1.0
  %v1032 = vrcp.pop %v1031
  %v1033 = vmul.f32 %v1031, %v1032
  %v1034 = vsub.f32 1.0, %v1033
  %v1035 = vmul.f32 %v1032, %v1034
  %v1036 = vadd.f32 %v1032, %v1035
  %vm1037 = vweird.f32 %v1031
  %vm1038 = vweird.f32 %v1032
  %vm1039 = vmor %vm1037, %vm1038
  %v1040 = vsel %vm1039, %v1032, %v1036
  %v1041 = vand.u32 2147483647, %v1031
  %vm1042 = vcmp.eq.f32.partialorder %v1041, 8.507059e+37
  %v1043 = vand.u32 %v1031, 2147483648
  %v1044 = vor.u32 1.1754944e-38, %v1043
  %v1045 = vsel %vm1042, %v1044, %v1040
  %v1046 = vmul.f32 1.0, %v1045
  %v1047 = vtanh.pop %v990
  %v1048 = vmul.f32 %v1046, %v926
  %1050 = vrot.lane.b32.xlu0 %v1047, 32
  %v1051 = vpop.permute.xlu0 %1050
  %v1053 = vmul.f32 %v1046, %v1051
  %1055 = vrot.lane.b32.xlu0 %v1053, 32
  %v1056 = vpop.permute.xlu0 %1055
  %v1058 = vadd.f32 %v1048, %v1056
  %v1059 = vtanh.pop %v1058
  %1061 = vrot.lane.b32.xlu0 %v1059, 32
  %v1062 = vpop.permute.xlu0 %1061
  %v1064 = vmul.f32 %v1046, %v1062
  %v1065 = vadd.f32 %v933, %v1027
  %v1066 = vadd.f32 %v934, %v1064
  %v1067 = vmax.f32 %v935, %v1027
  %v1068 = vmax.f32 %v936, %v1064
  %v1069 = vld [vmem:[%s189] sm:$0xff]
  %1071 = vrot.lane.b32.xlu0 %v1027, 64
  %v1072 = vpop.permute.xlu0 %1071
  %v1073 = vsel %vm56, %v1072, 0
  %1075 = vmatpush.msra.mxu0 0.0
  %1076 = vmatpush.msra.mxu0 0.0
  %1077 = vmatpush.msra.mxu0 0.0
  %1078 = vmatpush.msra.mxu0 0.0
  %1079 = vmatpush.msra.mxu0 0.0
  %1080 = vmatpush.msra.mxu0 0.0
  %1081 = vmatpush.msra.mxu0 0.0
  %1082 = vmatpush.msra.mxu0 0.0
  %1083 = vmatpush.msra.mxu0 0.0
  %1084 = vmatpush.msra.mxu0 0.0
  %1085 = vmatpush.msra.mxu0 0.0
  %1086 = vmatpush.msra.mxu0 0.0
  %1087 = vmatpush.msra.mxu0 %v196
  %1088 = vmatpush.msra.mxu0 %v195
  %1089 = vmatpush.msra.mxu0 %v194
  %1090 = vmatpush.msra.mxu0 %v193
  %1091 = vmatmul.f32.gmra.mxu0 %v1073
  %v1092 = vpop.f32.mrf.mxu0
  %v1093 = vadd.f32 0.0, %v1092
  %1094 = vdwg.mxu0
  %v1095 = vadd.f32 %v1069, %v1093
  %v1096 = vld [vmem:[#allocation3] sm:$0xff]
  %1098 = vrot.lane.b32.xlu0 %v1064, 64
  %v1099 = vpop.permute.xlu0 %1098
  %v1100 = vsel %vm56, %v1099, 0
  %1102 = vmatpush.msra.mxu0 0.0
  %1103 = vmatpush.msra.mxu0 0.0
  %1104 = vmatpush.msra.mxu0 0.0
  %1105 = vmatpush.msra.mxu0 0.0
  %1106 = vmatpush.msra.mxu0 0.0
  %1107 = vmatpush.msra.mxu0 0.0
  %1108 = vmatpush.msra.mxu0 0.0
  %1109 = vmatpush.msra.mxu0 0.0
  %1110 = vmatpush.msra.mxu0 0.0
  %1111 = vmatpush.msra.mxu0 0.0
  %1112 = vmatpush.msra.mxu0 0.0
  %1113 = vmatpush.msra.mxu0 0.0
  %1114 = vmatpush.msra.mxu0 %v200
  %1115 = vmatpush.msra.mxu0 %v199
  %1116 = vmatpush.msra.mxu0 %v198
  %1117 = vmatpush.msra.mxu0 %v197
  %1118 = vmatmul.f32.gmra.mxu0 %v1100
  %v1119 = vpop.f32.mrf.mxu0
  %v1120 = vadd.f32 0.0, %v1119
  %1121 = vdwg.mxu0
  %v1122 = vadd.f32 %v1096, %v1120
  %v1123 = vxor.u32 %v1095, 2147483648
  %v1124 = vmul.f32 %v1123, 1.442695
  %v1125 = vpow.pop %v1124
  %v1126 = vadd.f32 %v1125, 1.0
  %v1127 = vrcp.pop %v1126
  %v1128 = vmul.f32 %v1126, %v1127
  %v1129 = vsub.f32 1.0, %v1128
  %v1130 = vmul.f32 %v1127, %v1129
  %v1131 = vadd.f32 %v1127, %v1130
  %vm1132 = vweird.f32 %v1126
  %vm1133 = vweird.f32 %v1127
  %vm1134 = vmor %vm1132, %vm1133
  %v1135 = vsel %vm1134, %v1127, %v1131
  %v1136 = vand.u32 2147483647, %v1126
  %vm1137 = vcmp.eq.f32.partialorder %v1136, 8.507059e+37
  %v1138 = vand.u32 %v1126, 2147483648
  %v1139 = vor.u32 1.1754944e-38, %v1138
  %v1140 = vsel %vm1137, %v1139, %v1135
  %v1141 = vmul.f32 1.0, %v1140
  %v1142 = vtanh.pop %v1095
  %v1143 = vmul.f32 %v1141, %v1021
  %1145 = vrot.lane.b32.xlu0 %v1142, 32
  %v1146 = vpop.permute.xlu0 %1145
  %v1148 = vmul.f32 %v1141, %v1146
  %1150 = vrot.lane.b32.xlu0 %v1148, 32
  %v1151 = vpop.permute.xlu0 %1150
  %v1153 = vadd.f32 %v1143, %v1151
  %v1154 = vtanh.pop %v1153
  %1156 = vrot.lane.b32.xlu0 %v1154, 32
  %v1157 = vpop.permute.xlu0 %1156
  %v1159 = vmul.f32 %v1141, %v1157
  %v1160 = vxor.u32 %v1122, 2147483648
  %v1161 = vmul.f32 %v1160, 1.442695
  %v1162 = vpow.pop %v1161
  %v1163 = vadd.f32 %v1162, 1.0
  %v1164 = vrcp.pop %v1163
  %v1165 = vmul.f32 %v1163, %v1164
  %v1166 = vsub.f32 1.0, %v1165
  %v1167 = vmul.f32 %v1164, %v1166
  %v1168 = vadd.f32 %v1164, %v1167
  %vm1169 = vweird.f32 %v1163
  %vm1170 = vweird.f32 %v1164
  %vm1171 = vmor %vm1169, %vm1170
  %v1172 = vsel %vm1171, %v1164, %v1168
  %v1173 = vand.u32 2147483647, %v1163
  %vm1174 = vcmp.eq.f32.partialorder %v1173, 8.507059e+37
  %v1175 = vand.u32 %v1163, 2147483648
  %v1176 = vor.u32 1.1754944e-38, %v1175
  %v1177 = vsel %vm1174, %v1176, %v1172
  %v1178 = vmul.f32 1.0, %v1177
  %v1179 = vtanh.pop %v1122
  %v1180 = vmul.f32 %v1178, %v1058
  %1182 = vrot.lane.b32.xlu0 %v1179, 32
  %v1183 = vpop.permute.xlu0 %1182
  %v1185 = vmul.f32 %v1178, %v1183
  %1187 = vrot.lane.b32.xlu0 %v1185, 32
  %v1188 = vpop.permute.xlu0 %1187
  %v1190 = vadd.f32 %v1180, %v1188
  %v1191 = vtanh.pop %v1190
  %1193 = vrot.lane.b32.xlu0 %v1191, 32
  %v1194 = vpop.permute.xlu0 %1193
  %v1196 = vmul.f32 %v1178, %v1194
  %v1197 = vadd.f32 %v1065, %v1159
  %v1198 = vadd.f32 %v1066, %v1196
  %v1199 = vmax.f32 %v1067, %v1159
  %v1200 = vmax.f32 %v1068, %v1196
  %v1201 = vmul.f32 %v1197, 0.125
  %v1202 = vmul.f32 %v1198, 0.125
  %v1203 = vld [vmem:[%s5] sm:$0xff]
  %v1204 = vld [vmem:[%s5 + $0x8] sm:$0xff]
  %v1205 = vld [vmem:[%s5 + $0x10] sm:$0xff]
  %v1206 = vld [vmem:[%s5 + $0x18] sm:$0xff]
  %v1207 = vld [vmem:[%s5 + $0x20] sm:$0xff]
  %v1208 = vld [vmem:[%s5 + $0x28] sm:$0xff]
  %v1209 = vld [vmem:[%s5 + $0x30] sm:$0xff]
  %v1210 = vld [vmem:[%s5 + $0x38] sm:$0xff]
  %1212 = vrot.lane.b32.xlu0 %v1202, 64
  %v1213 = vpop.permute.xlu0 %1212
  %v1214 = vsel %vm56, %v1213, 0
  %1216 = vmatpush.msra.mxu0 0.0
  %1217 = vmatpush.msra.mxu0 0.0
  %1218 = vmatpush.msra.mxu0 0.0
  %1219 = vmatpush.msra.mxu0 0.0
  %1220 = vmatpush.msra.mxu0 0.0
  %1221 = vmatpush.msra.mxu0 0.0
  %1222 = vmatpush.msra.mxu0 0.0
  %1223 = vmatpush.msra.mxu0 0.0
  %1224 = vmatpush.msra.mxu0 0.0
  %1225 = vmatpush.msra.mxu0 0.0
  %1226 = vmatpush.msra.mxu0 0.0
  %1227 = vmatpush.msra.mxu0 0.0
  %1228 = vmatpush.msra.mxu0 %v1210
  %1229 = vmatpush.msra.mxu0 %v1209
  %1230 = vmatpush.msra.mxu0 %v1208
  %1231 = vmatpush.msra.mxu0 %v1207
  %1232 = vmatmul.f32.gmra.mxu0 %v1214
  %v1233 = vpop.f32.mrf.mxu0
  %v1234 = vadd.f32 0.0, %v1233
  %1235 = vdwg.mxu0
  %1237 = vrot.lane.b32.xlu0 %v1201, 64
  %v1238 = vpop.permute.xlu0 %1237
  %v1239 = vsel %vm56, %v1238, 0
  %1241 = vmatpush.msra.mxu0 0.0
  %1242 = vmatpush.msra.mxu0 0.0
  %1243 = vmatpush.msra.mxu0 0.0
  %1244 = vmatpush.msra.mxu0 0.0
  %1245 = vmatpush.msra.mxu0 0.0
  %1246 = vmatpush.msra.mxu0 0.0
  %1247 = vmatpush.msra.mxu0 0.0
  %1248 = vmatpush.msra.mxu0 0.0
  %1249 = vmatpush.msra.mxu0 0.0
  %1250 = vmatpush.msra.mxu0 0.0
  %1251 = vmatpush.msra.mxu0 0.0
  %1252 = vmatpush.msra.mxu0 0.0
  %1253 = vmatpush.msra.mxu0 %v1206
  %1254 = vmatpush.msra.mxu0 %v1205
  %1255 = vmatpush.msra.mxu0 %v1204
  %1256 = vmatpush.msra.mxu0 %v1203
  %1257 = vmatmul.f32.gmra.mxu0 %v1239
  %v1258 = vpop.f32.mrf.mxu0
  %v1259 = vadd.f32 %v1234, %v1258
  %1260 = vdwg.mxu0
  %v1261 = vld [vmem:[%s5 + $0x40] sm:$0xff]
  %v1262 = vld [vmem:[%s5 + $0x48] sm:$0xff]
  %v1263 = vld [vmem:[%s5 + $0x50] sm:$0xff]
  %v1264 = vld [vmem:[%s5 + $0x58] sm:$0xff]
  %1266 = vrot.lane.b32.xlu0 %v1199, 64
  %v1267 = vpop.permute.xlu0 %1266
  %v1268 = vsel %vm56, %v1267, 0
  %1270 = vmatpush.msra.mxu0 0.0
  %1271 = vmatpush.msra.mxu0 0.0
  %1272 = vmatpush.msra.mxu0 0.0
  %1273 = vmatpush.msra.mxu0 0.0
  %1274 = vmatpush.msra.mxu0 0.0
  %1275 = vmatpush.msra.mxu0 0.0
  %1276 = vmatpush.msra.mxu0 0.0
  %1277 = vmatpush.msra.mxu0 0.0
  %1278 = vmatpush.msra.mxu0 0.0
  %1279 = vmatpush.msra.mxu0 0.0
  %1280 = vmatpush.msra.mxu0 0.0
  %1281 = vmatpush.msra.mxu0 0.0
  %1282 = vmatpush.msra.mxu0 %v1264
  %1283 = vmatpush.msra.mxu0 %v1263
  %1284 = vmatpush.msra.mxu0 %v1262
  %1285 = vmatpush.msra.mxu0 %v1261
  %1286 = vmatmul.f32.gmra.mxu0 %v1268
  %v1287 = vpop.f32.mrf.mxu0
  %v1288 = vadd.f32 0.0, %v1287
  %1289 = vdwg.mxu0
  %v1290 = vadd.f32 %v1259, %v1288
  %v1291 = vld [vmem:[%s5 + $0x60] sm:$0xff]
  %v1292 = vld [vmem:[%s5 + $0x68] sm:$0xff]
  %v1293 = vld [vmem:[%s5 + $0x70] sm:$0xff]
  %v1294 = vld [vmem:[%s5 + $0x78] sm:$0xff]
  %1296 = vrot.lane.b32.xlu0 %v1200, 64
  %v1297 = vpop.permute.xlu0 %1296
  %v1298 = vsel %vm56, %v1297, 0
  %1300 = vmatpush.msra.mxu0 0.0
  %1301 = vmatpush.msra.mxu0 0.0
  %1302 = vmatpush.msra.mxu0 0.0
  %1303 = vmatpush.msra.mxu0 0.0
  %1304 = vmatpush.msra.mxu0 0.0
  %1305 = vmatpush.msra.mxu0 0.0
  %1306 = vmatpush.msra.mxu0 0.0
  %1307 = vmatpush.msra.mxu0 0.0
  %1308 = vmatpush.msra.mxu0 0.0
  %1309 = vmatpush.msra.mxu0 0.0
  %1310 = vmatpush.msra.mxu0 0.0
  %1311 = vmatpush.msra.mxu0 0.0
  %1312 = vmatpush.msra.mxu0 %v1294
  %1313 = vmatpush.msra.mxu0 %v1293
  %1314 = vmatpush.msra.mxu0 %v1292
  %1315 = vmatpush.msra.mxu0 %v1291
  %1316 = vmatmul.f32.gmra.mxu0 %v1298
  %v1317 = vpop.f32.mrf.mxu0
  %v1318 = vadd.f32 0.0, %v1317
  %1319 = vdwg.mxu0
  %v1320 = vadd.f32 %v1290, %v1318
  %v1321 = vld [vmem:[%s6] sm:$0x1]
  %v1323 = vperm.slane %v1321, 0
  %v1325 = vadd.f32 %v1320, %v1323
  %v1326 = vmax.f32 %v1325, 0.0
  %v1327 = vld [vmem:[%s7] sm:$0xff]
  %v1328 = vld [vmem:[%s7 + $0x8] sm:$0xff]
  %v1329 = vld [vmem:[%s7 + $0x10] sm:$0xff]
  %v1330 = vld [vmem:[%s7 + $0x18] sm:$0xff]
  %v1331 = vld [vmem:[%s7 + $0x20] sm:$0xff]
  %v1332 = vld [vmem:[%s7 + $0x28] sm:$0xff]
  %v1333 = vld [vmem:[%s7 + $0x30] sm:$0xff]
  %v1334 = vld [vmem:[%s7 + $0x38] sm:$0xff]
  %v1335 = vld [vmem:[#allocation4] sm:$0x1]
  %v1337 = vperm.slane %v1335, 0
  %vm1339 = vcmask 523264
  %v1341 = vsel %vm1339, %v1326, 0
  %1343 = vmatpush.msra.mxu0 0.0
  %1344 = vmatpush.msra.mxu0 0.0
  %1345 = vmatpush.msra.mxu0 0.0
  %1346 = vmatpush.msra.mxu0 0.0
  %1347 = vmatpush.msra.mxu0 0.0
  %1348 = vmatpush.msra.mxu0 0.0
  %1349 = vmatpush.msra.mxu0 0.0
  %1350 = vmatpush.msra.mxu0 0.0
  %1351 = vmatpush.msra.mxu0 %v1334
  %1352 = vmatpush.msra.mxu0 %v1333
  %1353 = vmatpush.msra.mxu0 %v1332
  %1354 = vmatpush.msra.mxu0 %v1331
  %1355 = vmatpush.msra.mxu0 %v1330
  %1356 = vmatpush.msra.mxu0 %v1329
  %1357 = vmatpush.msra.mxu0 %v1328
  %1358 = vmatpush.msra.mxu0 %v1327
  %1359 = vmatmul.f32.gmra.mxu0 %v1341
  %v1360 = vpop.f32.mrf.mxu0
  %v1361 = vadd.f32 %v1337, %v1360
  %1362 = vdwg.mxu0
  %vm1363 = vcmask 7168
  %1364 = vst.msk [vmem:[%s9] sm:$0xff] %vm1363, %v1361
  // Predicated region
  $region38: #{tpu_custom_call.1} parent=0 // pred_check
    _
  $region39: #{tpu_custom_call.1} parent=0 // pred_check_branch
    %1366 = sbr.rel (0) target = $region41
  $region40: #{tpu_custom_call.1} parent=0 // pred_region
    _
  $region41: #{tpu_custom_call.1} parent=0 // pred_fallthru
    _
  // Predicated region
  $region42: #{tpu_custom_call.1} parent=0 // pred_check
    _
  $region43: #{tpu_custom_call.1} parent=0 // pred_check_branch
    %1368 = sbr.rel (0) target = $region45
  $region44: #{tpu_custom_call.1} parent=0 // pred_region
    _
  $region45: #{tpu_custom_call.1} parent=0 // pred_fallthru
    _

</llo_original>
